<compile_context>
chip_gen: v7x
topology: tpu7x:2x2x1
jax: 0.10.0
libtpu: 0.0.40
codegen_flags: <defaults>
</compile_context>

<pallas_src>
import functools

import jax
import jax.numpy as jnp
from jax.experimental import pallas as pl
from jax.experimental.pallas import tpu as pltpu


_HP = 128      # packed hidden width: one 128-lane block holds BOTH RNN states
_DE_OFF = 64   # decay hidden occupies lanes [_DE_OFF, _DE_OFF + Kd)


def _softplus(x):
    # torch.nn.Softplus(beta=1) with numerical threshold (=20).
    return jnp.where(x > 20.0, x, jnp.log1p(jnp.exp(jnp.minimum(x, 20.0))))


def _round_up(n, m):
    return ((n + m - 1) // m) * m


def _make_kernel(L, T, Nb, Gp, unmodified_counts, cdt):
    """Fused kernel: window of L steps + T recursive prediction steps.

    Block layout: each grid step processes Nb batch rows; the x block is a
    time-major slab of shape (1, L*Nb, Gp) where row t*Nb + n is time t of
    batch row n.  Outputs are (1, (L+T)*Nb, .) slabs in the same ordering.
    """

    def kernel(x_ref, w_in_ref, w_ih_ref, w_hh_ref, w_dec_ref,
               v_ref, c_ref, d_ref, tfa_ref):
        x2 = x_ref[0]                                          # (L*Nb, Gp) f32

        # Lane mask: lanes [0, _DE_OFF) = transcription state, rest = decay state.
        lane = jax.lax.broadcasted_iota(jnp.int32, (1, _HP), 1)
        is_enc = lane < _DE_OFF

        def in_proj(xrows):
            # Fused [we | wde] projection; relu on enc lanes, softplus on de lanes.
            z = jnp.dot(xrows.astype(cdt), w_in_ref[...],
                        preferred_element_type=jnp.float32)    # (rows, HP)
            return jnp.where(is_enc, jnp.maximum(z, 0.0), _softplus(z))

        def rnn_act(z):
            # nn.RNN relu nonlinearity on enc lanes, tanh on decay lanes.
            return jnp.where(is_enc, jnp.maximum(z, 0.0), jnp.tanh(z))

        def decode(hrows, xrows):
            # Fused [wdec ; wdd] decoder: one (.,128)x(128,2*Gp) matmul yields
            # both x_pos (cols [0,Gp)) and the decay preact (cols [Gp,2Gp)).
            z = jnp.dot(hrows.astype(cdt), w_dec_ref[...],
                        preferred_element_type=jnp.float32)    # (rows, 2*Gp)
            x_pos = jnp.maximum(z[:, :Gp], 0.0)
            dd = -_softplus(z[:, Gp:])
            return x_pos + dd * xrows, dd

        # --- input window: dense input & input->hidden projections (1 MXU pass each)
        ed = in_proj(x2)                                       # (L*Nb, HP)
        ih = jnp.dot(ed.astype(cdt), w_ih_ref[...],
                     preferred_element_type=jnp.float32)       # (L*Nb, HP)

        # --- serial recurrence over time, fully unrolled, 1 MXU op per step ---
        h = jnp.zeros((Nb, _HP), jnp.float32)                  # packed hidden
        hs = []
        for t in range(L):                                     # L static: unroll
            r0 = t * Nb
            h = rnn_act(ih[r0:r0 + Nb, :]
                        + jnp.dot(h.astype(cdt), w_hh_ref[...],
                                  preferred_element_type=jnp.float32))
            hs.append(h)
        H = jnp.concatenate(hs, axis=0)                        # (L*Nb, HP)

        vel, dd = decode(H, x2)                                # dense decoder pass
        cnt = x2 if unmodified_counts else jnp.maximum(x2 + vel, 0.0)

        # --- n_time_steps recursion: weights stay VMEM-resident, 3 MXU ops/step
        xc = cnt[(L - 1) * Nb:, :]                             # last-step counts
        vs, cs, ds, ths = [], [], [], []
        for _ in range(T):                                     # T static: unroll
            ed_s = in_proj(xc)
            h = rnn_act(jnp.dot(ed_s.astype(cdt), w_ih_ref[...],
                                preferred_element_type=jnp.float32)
                        + jnp.dot(h.astype(cdt), w_hh_ref[...],
                                  preferred_element_type=jnp.float32))
            vel_s, dd_s = decode(h, xc)
            xc = jnp.maximum(xc + vel_s, 0.0)
            vs.append(vel_s)
            cs.append(xc)
            ds.append(dd_s)
            ths.append(h)

        # --- one dense, lane-dense slab store per output (no per-step stores) ---
        if T > 0:
            vel = jnp.concatenate([vel] + vs, axis=0)
            cnt = jnp.concatenate([cnt] + cs, axis=0)
            dd = jnp.concatenate([dd] + ds, axis=0)
            H = jnp.concatenate([H] + ths, axis=0)
        v_ref[0, :, :] = vel
        c_ref[0, :, :] = cnt
        d_ref[0, :, :] = dd
        tfa_ref[0, :, :] = H

    return kernel


@functools.partial(jax.jit, static_argnames=("n_time_steps", "unmodified_counts"))
def supirfactor_biophysical_forward(x, params, n_time_steps=0,
                                    unmodified_counts=False):
    """Mirrors SupirFactorBiophysical.forward (return_submodels=False)."""
    N, L, G = x.shape
    K = params["we"].shape[1]
    Kd = params["wde"].shape[1]
    # TODO(synk): generalize the lane-packing for K or Kd > 64 (split packing).
    assert K <= _DE_OFF and Kd <= _HP - _DE_OFF

    f32 = jnp.float32
    cdt = jnp.bfloat16            # MXU operand dtype; accumulation stays f32

    # Batch rows per grid block: multiples of 8 up to 128; for N > 8 keep at
    # least 2 grid blocks so v7x's two TensorCores can both take batch work.
    Nb = min(128, _round_up(N, 8))
    if N > 8:
        Nb = min(Nb, _round_up((N + 1) // 2, 8))
    Np = _round_up(N, Nb)
    B = Np // Nb                  # grid length (batch blocks)
    Gp = _round_up(G, 128)        # lane-dense gene dim
    T = int(n_time_steps)
    LT = L + T

    # --- fused / lane-packed weights (padded blocks are exactly zero) -------
    w_in = jnp.zeros((Gp, _HP), f32)
    w_in = w_in.at[:G, :K].set(params["we"].astype(f32))
    w_in = w_in.at[:G, _DE_OFF:_DE_OFF + Kd].set(params["wde"].astype(f32))

    w_ih = jnp.zeros((_HP, _HP), f32)
    w_ih = w_ih.at[:K, :K].set(params["wih"].astype(f32))
    w_ih = w_ih.at[_DE_OFF:_DE_OFF + Kd, _DE_OFF:_DE_OFF + Kd].set(
        params["wdih"].astype(f32))

    w_hh = jnp.zeros((_HP, _HP), f32)
    w_hh = w_hh.at[:K, :K].set(params["whh"].astype(f32))
    w_hh = w_hh.at[_DE_OFF:_DE_OFF + Kd, _DE_OFF:_DE_OFF + Kd].set(
        params["wdhh"].astype(f32))

    w_dec = jnp.zeros((_HP, 2 * Gp), f32)
    w_dec = w_dec.at[:K, :G].set(params["wdec"].astype(f32))
    w_dec = w_dec.at[_DE_OFF:_DE_OFF + Kd, Gp:Gp + G].set(params["wdd"].astype(f32))

    w_in = w_in.astype(cdt)
    w_ih = w_ih.astype(cdt)
    w_hh = w_hh.astype(cdt)
    w_dec = w_dec.astype(cdt)

    # (N, L, G) -> per-block time-major slabs (B, L*Nb, Gp); row t*Nb + n of
    # block b is time t of batch row b*Nb + n.  Padded rows/lanes are zero.
    xw = jnp.pad(x.astype(f32), ((0, Np - N), (0, 0), (0, Gp - G)))
    xw = xw.reshape(B, Nb, L, Gp).transpose(0, 2, 1, 3).reshape(B, L * Nb, Gp)

    kernel = _make_kernel(L, T, Nb, Gp, unmodified_counts, cdt)

    def slab_spec(rows, cols):
        return pl.BlockSpec((1, rows, cols), lambda i: (i, 0, 0))

    def w_spec(r, c):
        # Constant index_map: weights are loaded once and reused every grid step.
        # TODO(synk): pipeline_mode=pl.Buffered(1) would single-buffer the
        # weight tiles on v7x for very large G; left default for portability.
        return pl.BlockSpec((r, c), lambda i: (0, 0))

    # Derived VMEM budget: double-buffered pipeline I/O + weights, with 4x
    # headroom for compiler scratch / spilled intermediates; clamped to stay
    # well under v7x's 64 MiB physical per-TensorCore VMEM.
    io_bytes = (
        2 * (L * Nb * Gp * 4)                                    # x slab (in)
        + 2 * 3 * (LT * Nb * Gp * 4)                             # v, counts, decay (out)
        + 2 * (LT * Nb * _HP * 4)                                # tfa (out)
        + 2 * (Gp * _HP + 2 * _HP * _HP + _HP * 2 * Gp) * 2      # bf16 weights
    )
    vmem_limit = int(min(max(4 * io_bytes, 16 << 20), 48 << 20))

    out_shape = (
        jax.ShapeDtypeStruct((B, LT * Nb, Gp), f32),   # velocity
        jax.ShapeDtypeStruct((B, LT * Nb, Gp), f32),   # counts
        jax.ShapeDtypeStruct((B, LT * Nb, Gp), f32),   # decay rate
        jax.ShapeDtypeStruct((B, LT * Nb, _HP), f32),  # tfa (packed hidden)
    )

    v, c, d, tfa = pl.pallas_call(
        kernel,
        out_shape=out_shape,
        grid_spec=pltpu.PrefetchScalarGridSpec(
            num_scalar_prefetch=0,
            grid=(B,),
            in_specs=[
                slab_spec(L * Nb, Gp),                 # x window slab
                w_spec(Gp, _HP),                       # [we | wde]
                w_spec(_HP, _HP),                      # [wih (+) wdih]
                w_spec(_HP, _HP),                      # [whh (+) wdhh]
                w_spec(_HP, 2 * Gp),                   # [wdec ; wdd]
            ],
            out_specs=(
                slab_spec(LT * Nb, Gp),
                slab_spec(LT * Nb, Gp),
                slab_spec(LT * Nb, Gp),
                slab_spec(LT * Nb, _HP),
            ),
        ),
        compiler_params=pltpu.CompilerParams(
            dimension_semantics=("parallel",),
            vmem_limit_bytes=vmem_limit),
    )(xw, w_in, w_ih, w_hh, w_dec)

    # Back to (N, L+T, .), strip batch / lane padding.
    def unpack(o, valid_cols):
        cols = o.shape[-1]
        o = o.reshape(B, LT, Nb, cols).transpose(0, 2, 1, 3).reshape(Np, LT, cols)
        return o[:N, :, :valid_cols]

    return unpack(v, G), unpack(c, G), unpack(d, G), unpack(tfa, K)


def _reference_forward(x, params, n_time_steps=0, unmodified_counts=False):
    """Pure-JAX mirror of the module math (validation only, f32 HIGHEST)."""
    N, L, _ = x.shape
    K = params["we"].shape[1]
    Kd = params["wde"].shape[1]
    hp = jax.lax.Precision.HIGHEST

    def sp(z):
        return jnp.where(z > 20.0, z, jnp.log1p(jnp.exp(jnp.minimum(z, 20.0))))

    def step(xt, h, hd):
        enc = jax.nn.relu(jnp.dot(xt, params["we"], precision=hp))
        de = sp(jnp.dot(xt, params["wde"], precision=hp))
        h = jax.nn.relu(jnp.dot(enc, params["wih"], precision=hp)
                        + jnp.dot(h, params["whh"], precision=hp))
        hd = jnp.tanh(jnp.dot(de, params["wdih"], precision=hp)
                      + jnp.dot(hd, params["wdhh"], precision=hp))
        xpos = jax.nn.relu(jnp.dot(h, params["wdec"], precision=hp))
        dd = -sp(jnp.dot(hd, params["wdd"], precision=hp))
        return h, hd, xpos + dd * xt, dd

    h = jnp.zeros((N, K), jnp.float32)
    hd = jnp.zeros((N, Kd), jnp.float32)
    vs, cs, ds, tf = [], [], [], []
    for t in range(L):
        xt = x[:, t, :]
        h, hd, v, dd = step(xt, h, hd)
        c = xt if unmodified_counts else jax.nn.relu(xt + v)
        vs.append(v), cs.append(c), ds.append(dd), tf.append(h)
    xc = cs[-1]
    for _ in range(n_time_steps):
        h, hd, v, dd = step(xc, h, hd)
        xc = jax.nn.relu(xc + v)
        vs.append(v), cs.append(xc), ds.append(dd), tf.append(h)
    stk = lambda lst: jnp.stack(lst, axis=1)
    return stk(vs), stk(cs), stk(ds), stk(tf)


def init_params(key, G, K, Kd, scale=0.1):
    ks = jax.random.split(key, 9)
    # prior network mask (genes x TFs), ~30% density, deterministic
    mask = jax.random.bernoulli(ks[0], 0.3, (G, K)).astype(jnp.float32)
    return dict(
        we=jax.random.normal(ks[1], (G, K), jnp.float32) * scale * mask,
        wih=jax.random.normal(ks[2], (K, K), jnp.float32) * scale,
        whh=jax.random.normal(ks[3], (K, K), jnp.float32) * scale,
        wdec=jax.random.normal(ks[4], (K, G), jnp.float32) * scale,
        wde=jax.random.normal(ks[5], (G, Kd), jnp.float32) * scale,
        wdih=jax.random.normal(ks[6], (Kd, Kd), jnp.float32) * scale,
        wdhh=jax.random.normal(ks[7], (Kd, Kd), jnp.float32) * scale,
        wdd=jax.random.normal(ks[8], (Kd, G), jnp.float32) * scale,
    )


if __name__ == "__main__":
    N, L, G, K, Kd = 2, 8, 64, 16, 20      # batch, seq, genes, TFs, decay_k(=20)
    n_time_steps = 2

    key = jax.random.PRNGKey(0)
    kx, kp = jax.random.split(key)
    # count data is non-negative
    x = jax.nn.relu(jax.random.normal(kx, (N, L, G), jnp.float32))
    params = init_params(kp, G, K, Kd)

    v, counts, decay, tfa = supirfactor_biophysical_forward(
        x, params, n_time_steps=n_time_steps)
    jax.block_until_ready((v, counts, decay, tfa))

    assert v.shape == (N, L + n_time_steps, G)
    assert counts.shape == (N, L + n_time_steps, G)
    assert decay.shape == (N, L + n_time_steps, G)
    assert tfa.shape == (N, L + n_time_steps, K)
    assert bool(jnp.all(counts >= 0.0))
    assert bool(jnp.all(decay <= 0.0))

    # Numerical check against a pure-JAX f32 reference; tolerance is
    # intentionally bf16-level since MXU operands are cast to bfloat16.
    rv, rc, rd, rt = _reference_forward(x, params, n_time_steps=n_time_steps)
    for got, want in ((v, rv), (counts, rc), (decay, rd), (tfa, rt)):
        err = float(jnp.max(jnp.abs(got - want)))
        assert bool(jnp.allclose(got, want, atol=5e-2, rtol=5e-2)), err

    # Also exercise the n_time_steps=0 path.
    v0, c0, d0, t0 = supirfactor_biophysical_forward(x, params, n_time_steps=0)
    jax.block_until_ready((v0, c0, d0, t0))
    assert v0.shape == (N, L, G) and t0.shape == (N, L, K)

    print("KERNEL_OK")
</pallas_src>

<mosaic_0001>
module attributes {stable_mosaic.version = 11 : i64} {
  func.func @kernel(%arg0: i32, %arg1: memref<1x64x128xf32, #tpu.memory_space<vmem>>, %arg2: memref<128x128xbf16, #tpu.memory_space<vmem>>, %arg3: memref<128x128xbf16, #tpu.memory_space<vmem>>, %arg4: memref<128x128xbf16, #tpu.memory_space<vmem>>, %arg5: memref<128x256xbf16, #tpu.memory_space<vmem>>, %arg6: memref<1x80x128xf32, #tpu.memory_space<vmem>>, %arg7: memref<1x80x128xf32, #tpu.memory_space<vmem>>, %arg8: memref<1x80x128xf32, #tpu.memory_space<vmem>>, %arg9: memref<1x80x128xf32, #tpu.memory_space<vmem>>) attributes {dimension_semantics = [#tpu.dimension_semantics<parallel>], iteration_bounds = array<i64: 1>, scalar_prefetch = 0 : i64, scratch_operands = 0 : i64, tpu.core_type = #tpu.core_type<tc>, window_params = [{transform_indices = @transform_0, window_bounds = array<i64: 1, 64, 128>}, {pipeline_mode = #tpu.pipeline_mode<synchronous>, transform_indices = @transform_1, window_bounds = array<i64: 128, 128>}, {pipeline_mode = #tpu.pipeline_mode<synchronous>, transform_indices = @transform_2, window_bounds = array<i64: 128, 128>}, {pipeline_mode = #tpu.pipeline_mode<synchronous>, transform_indices = @transform_3, window_bounds = array<i64: 128, 128>}, {pipeline_mode = #tpu.pipeline_mode<synchronous>, transform_indices = @transform_4, window_bounds = array<i64: 128, 256>}, {transform_indices = @transform_5, window_bounds = array<i64: 1, 80, 128>}, {transform_indices = @transform_6, window_bounds = array<i64: 1, 80, 128>}, {transform_indices = @transform_7, window_bounds = array<i64: 1, 80, 128>}, {transform_indices = @transform_8, window_bounds = array<i64: 1, 80, 128>}]} {
    %c0 = arith.constant 0 : index
    %c0_0 = arith.constant 0 : index
    %c0_1 = arith.constant 0 : index
    %0 = vector.load %arg1[%c0, %c0_0, %c0_1] : memref<1x64x128xf32, #tpu.memory_space<vmem>>, vector<1x64x128xf32>
    %1 = vector.shape_cast %0 : vector<1x64x128xf32> to vector<64x128xf32>
    %2 = tpu.iota {dimensions = array<i32: 1>} : vector<1x128xi32>
    %c64_i32 = arith.constant 64 : i32
    %3 = vector.broadcast %c64_i32 : i32 to vector<1x128xi32>
    %4 = arith.cmpi slt, %2, %3 : vector<1x128xi32>
    %5 = arith.truncf %1 : vector<64x128xf32> to vector<64x128xbf16>
    %c0_2 = arith.constant 0 : index
    %c0_3 = arith.constant 0 : index
    %6 = vector.load %arg2[%c0_2, %c0_3] : memref<128x128xbf16, #tpu.memory_space<vmem>>, vector<128x128xbf16>
    %cst = arith.constant dense<0.000000e+00> : vector<64x128xf32>
    %7 = tpu.matmul %5, %6, %cst {dimension_numbers = #tpu.dot_dimension_numbers<[1], [0], [0], [1], [0, 0, 1, 1], [], []>} : vector<64x128xbf16>, vector<128x128xbf16>, vector<64x128xf32> -> vector<64x128xf32>
    %cst_4 = arith.constant 0.000000e+00 : f32
    %8 = vector.broadcast %cst_4 : f32 to vector<64x128xf32>
    %9 = arith.maximumf %7, %8 : vector<64x128xf32>
    %cst_5 = arith.constant 2.000000e+01 : f32
    %10 = vector.broadcast %cst_5 : f32 to vector<64x128xf32>
    %11 = arith.cmpf ogt, %7, %10 : vector<64x128xf32>
    %cst_6 = arith.constant 2.000000e+01 : f32
    %12 = vector.broadcast %cst_6 : f32 to vector<64x128xf32>
    %13 = arith.minimumf %7, %12 : vector<64x128xf32>
    %14 = math.exp %13 : vector<64x128xf32>
    %15 = math.log1p %14 : vector<64x128xf32>
    %16 = arith.select %11, %7, %15 : vector<64x128xi1>, vector<64x128xf32>
    %17 = vector.shape_cast %4 : vector<1x128xi1> to vector<1x128xi1>
    %18 = vector.broadcast %17 : vector<1x128xi1> to vector<64x128xi1>
    %19 = arith.select %18, %9, %16 : vector<64x128xi1>, vector<64x128xf32>
    %20 = arith.truncf %19 : vector<64x128xf32> to vector<64x128xbf16>
    %c0_7 = arith.constant 0 : index
    %c0_8 = arith.constant 0 : index
    %21 = vector.load %arg3[%c0_7, %c0_8] : memref<128x128xbf16, #tpu.memory_space<vmem>>, vector<128x128xbf16>
    %cst_9 = arith.constant dense<0.000000e+00> : vector<64x128xf32>
    %22 = tpu.matmul %20, %21, %cst_9 {dimension_numbers = #tpu.dot_dimension_numbers<[1], [0], [0], [1], [0, 0, 1, 1], [], []>} : vector<64x128xbf16>, vector<128x128xbf16>, vector<64x128xf32> -> vector<64x128xf32>
    %cst_10 = arith.constant 0.000000e+00 : f32
    %23 = vector.broadcast %cst_10 : f32 to vector<8x128xf32>
    %24 = vector.extract_strided_slice %22 {offsets = [0, 0], sizes = [8, 128], strides = [1, 1]} : vector<64x128xf32> to vector<8x128xf32>
    %25 = arith.truncf %23 : vector<8x128xf32> to vector<8x128xbf16>
    %c0_11 = arith.constant 0 : index
    %c0_12 = arith.constant 0 : index
    %26 = vector.load %arg4[%c0_11, %c0_12] : memref<128x128xbf16, #tpu.memory_space<vmem>>, vector<128x128xbf16>
    %cst_13 = arith.constant dense<0.000000e+00> : vector<8x128xf32>
    %27 = tpu.matmul %25, %26, %cst_13 {dimension_numbers = #tpu.dot_dimension_numbers<[1], [0], [0], [1], [0, 0, 1, 1], [], []>} : vector<8x128xbf16>, vector<128x128xbf16>, vector<8x128xf32> -> vector<8x128xf32>
    %28 = arith.addf %24, %27 : vector<8x128xf32>
    %cst_14 = arith.constant 0.000000e+00 : f32
    %29 = vector.broadcast %cst_14 : f32 to vector<8x128xf32>
    %30 = arith.maximumf %28, %29 : vector<8x128xf32>
    %31 = math.tanh %28 : vector<8x128xf32>
    %32 = vector.shape_cast %4 : vector<1x128xi1> to vector<1x128xi1>
    %33 = vector.broadcast %32 : vector<1x128xi1> to vector<8x128xi1>
    %34 = arith.select %33, %30, %31 : vector<8x128xi1>, vector<8x128xf32>
    %35 = vector.extract_strided_slice %22 {offsets = [8, 0], sizes = [8, 128], strides = [1, 1]} : vector<64x128xf32> to vector<8x128xf32>
    %36 = arith.truncf %34 : vector<8x128xf32> to vector<8x128xbf16>
    %c0_15 = arith.constant 0 : index
    %c0_16 = arith.constant 0 : index
    %37 = vector.load %arg4[%c0_15, %c0_16] : memref<128x128xbf16, #tpu.memory_space<vmem>>, vector<128x128xbf16>
    %cst_17 = arith.constant dense<0.000000e+00> : vector<8x128xf32>
    %38 = tpu.matmul %36, %37, %cst_17 {dimension_numbers = #tpu.dot_dimension_numbers<[1], [0], [0], [1], [0, 0, 1, 1], [], []>} : vector<8x128xbf16>, vector<128x128xbf16>, vector<8x128xf32> -> vector<8x128xf32>
    %39 = arith.addf %35, %38 : vector<8x128xf32>
    %cst_18 = arith.constant 0.000000e+00 : f32
    %40 = vector.broadcast %cst_18 : f32 to vector<8x128xf32>
    %41 = arith.maximumf %39, %40 : vector<8x128xf32>
    %42 = math.tanh %39 : vector<8x128xf32>
    %43 = vector.shape_cast %4 : vector<1x128xi1> to vector<1x128xi1>
    %44 = vector.broadcast %43 : vector<1x128xi1> to vector<8x128xi1>
    %45 = arith.select %44, %41, %42 : vector<8x128xi1>, vector<8x128xf32>
    %46 = vector.extract_strided_slice %22 {offsets = [16, 0], sizes = [8, 128], strides = [1, 1]} : vector<64x128xf32> to vector<8x128xf32>
    %47 = arith.truncf %45 : vector<8x128xf32> to vector<8x128xbf16>
    %c0_19 = arith.constant 0 : index
    %c0_20 = arith.constant 0 : index
    %48 = vector.load %arg4[%c0_19, %c0_20] : memref<128x128xbf16, #tpu.memory_space<vmem>>, vector<128x128xbf16>
    %cst_21 = arith.constant dense<0.000000e+00> : vector<8x128xf32>
    %49 = tpu.matmul %47, %48, %cst_21 {dimension_numbers = #tpu.dot_dimension_numbers<[1], [0], [0], [1], [0, 0, 1, 1], [], []>} : vector<8x128xbf16>, vector<128x128xbf16>, vector<8x128xf32> -> vector<8x128xf32>
    %50 = arith.addf %46, %49 : vector<8x128xf32>
    %cst_22 = arith.constant 0.000000e+00 : f32
    %51 = vector.broadcast %cst_22 : f32 to vector<8x128xf32>
    %52 = arith.maximumf %50, %51 : vector<8x128xf32>
    %53 = math.tanh %50 : vector<8x128xf32>
    %54 = vector.shape_cast %4 : vector<1x128xi1> to vector<1x128xi1>
    %55 = vector.broadcast %54 : vector<1x128xi1> to vector<8x128xi1>
    %56 = arith.select %55, %52, %53 : vector<8x128xi1>, vector<8x128xf32>
    %57 = vector.extract_strided_slice %22 {offsets = [24, 0], sizes = [8, 128], strides = [1, 1]} : vector<64x128xf32> to vector<8x128xf32>
    %58 = arith.truncf %56 : vector<8x128xf32> to vector<8x128xbf16>
    %c0_23 = arith.constant 0 : index
    %c0_24 = arith.constant 0 : index
    %59 = vector.load %arg4[%c0_23, %c0_24] : memref<128x128xbf16, #tpu.memory_space<vmem>>, vector<128x128xbf16>
    %cst_25 = arith.constant dense<0.000000e+00> : vector<8x128xf32>
    %60 = tpu.matmul %58, %59, %cst_25 {dimension_numbers = #tpu.dot_dimension_numbers<[1], [0], [0], [1], [0, 0, 1, 1], [], []>} : vector<8x128xbf16>, vector<128x128xbf16>, vector<8x128xf32> -> vector<8x128xf32>
    %61 = arith.addf %57, %60 : vector<8x128xf32>
    %cst_26 = arith.constant 0.000000e+00 : f32
    %62 = vector.broadcast %cst_26 : f32 to vector<8x128xf32>
    %63 = arith.maximumf %61, %62 : vector<8x128xf32>
    %64 = math.tanh %61 : vector<8x128xf32>
    %65 = vector.shape_cast %4 : vector<1x128xi1> to vector<1x128xi1>
    %66 = vector.broadcast %65 : vector<1x128xi1> to vector<8x128xi1>
    %67 = arith.select %66, %63, %64 : vector<8x128xi1>, vector<8x128xf32>
    %68 = vector.extract_strided_slice %22 {offsets = [32, 0], sizes = [8, 128], strides = [1, 1]} : vector<64x128xf32> to vector<8x128xf32>
    %69 = arith.truncf %67 : vector<8x128xf32> to vector<8x128xbf16>
    %c0_27 = arith.constant 0 : index
    %c0_28 = arith.constant 0 : index
    %70 = vector.load %arg4[%c0_27, %c0_28] : memref<128x128xbf16, #tpu.memory_space<vmem>>, vector<128x128xbf16>
    %cst_29 = arith.constant dense<0.000000e+00> : vector<8x128xf32>
    %71 = tpu.matmul %69, %70, %cst_29 {dimension_numbers = #tpu.dot_dimension_numbers<[1], [0], [0], [1], [0, 0, 1, 1], [], []>} : vector<8x128xbf16>, vector<128x128xbf16>, vector<8x128xf32> -> vector<8x128xf32>
    %72 = arith.addf %68, %71 : vector<8x128xf32>
    %cst_30 = arith.constant 0.000000e+00 : f32
    %73 = vector.broadcast %cst_30 : f32 to vector<8x128xf32>
    %74 = arith.maximumf %72, %73 : vector<8x128xf32>
    %75 = math.tanh %72 : vector<8x128xf32>
    %76 = vector.shape_cast %4 : vector<1x128xi1> to vector<1x128xi1>
    %77 = vector.broadcast %76 : vector<1x128xi1> to vector<8x128xi1>
    %78 = arith.select %77, %74, %75 : vector<8x128xi1>, vector<8x128xf32>
    %79 = vector.extract_strided_slice %22 {offsets = [40, 0], sizes = [8, 128], strides = [1, 1]} : vector<64x128xf32> to vector<8x128xf32>
    %80 = arith.truncf %78 : vector<8x128xf32> to vector<8x128xbf16>
    %c0_31 = arith.constant 0 : index
    %c0_32 = arith.constant 0 : index
    %81 = vector.load %arg4[%c0_31, %c0_32] : memref<128x128xbf16, #tpu.memory_space<vmem>>, vector<128x128xbf16>
    %cst_33 = arith.constant dense<0.000000e+00> : vector<8x128xf32>
    %82 = tpu.matmul %80, %81, %cst_33 {dimension_numbers = #tpu.dot_dimension_numbers<[1], [0], [0], [1], [0, 0, 1, 1], [], []>} : vector<8x128xbf16>, vector<128x128xbf16>, vector<8x128xf32> -> vector<8x128xf32>
    %83 = arith.addf %79, %82 : vector<8x128xf32>
    %cst_34 = arith.constant 0.000000e+00 : f32
    %84 = vector.broadcast %cst_34 : f32 to vector<8x128xf32>
    %85 = arith.maximumf %83, %84 : vector<8x128xf32>
    %86 = math.tanh %83 : vector<8x128xf32>
    %87 = vector.shape_cast %4 : vector<1x128xi1> to vector<1x128xi1>
    %88 = vector.broadcast %87 : vector<1x128xi1> to vector<8x128xi1>
    %89 = arith.select %88, %85, %86 : vector<8x128xi1>, vector<8x128xf32>
    %90 = vector.extract_strided_slice %22 {offsets = [48, 0], sizes = [8, 128], strides = [1, 1]} : vector<64x128xf32> to vector<8x128xf32>
    %91 = arith.truncf %89 : vector<8x128xf32> to vector<8x128xbf16>
    %c0_35 = arith.constant 0 : index
    %c0_36 = arith.constant 0 : index
    %92 = vector.load %arg4[%c0_35, %c0_36] : memref<128x128xbf16, #tpu.memory_space<vmem>>, vector<128x128xbf16>
    %cst_37 = arith.constant dense<0.000000e+00> : vector<8x128xf32>
    %93 = tpu.matmul %91, %92, %cst_37 {dimension_numbers = #tpu.dot_dimension_numbers<[1], [0], [0], [1], [0, 0, 1, 1], [], []>} : vector<8x128xbf16>, vector<128x128xbf16>, vector<8x128xf32> -> vector<8x128xf32>
    %94 = arith.addf %90, %93 : vector<8x128xf32>
    %cst_38 = arith.constant 0.000000e+00 : f32
    %95 = vector.broadcast %cst_38 : f32 to vector<8x128xf32>
    %96 = arith.maximumf %94, %95 : vector<8x128xf32>
    %97 = math.tanh %94 : vector<8x128xf32>
    %98 = vector.shape_cast %4 : vector<1x128xi1> to vector<1x128xi1>
    %99 = vector.broadcast %98 : vector<1x128xi1> to vector<8x128xi1>
    %100 = arith.select %99, %96, %97 : vector<8x128xi1>, vector<8x128xf32>
    %101 = vector.extract_strided_slice %22 {offsets = [56, 0], sizes = [8, 128], strides = [1, 1]} : vector<64x128xf32> to vector<8x128xf32>
    %102 = arith.truncf %100 : vector<8x128xf32> to vector<8x128xbf16>
    %c0_39 = arith.constant 0 : index
    %c0_40 = arith.constant 0 : index
    %103 = vector.load %arg4[%c0_39, %c0_40] : memref<128x128xbf16, #tpu.memory_space<vmem>>, vector<128x128xbf16>
    %cst_41 = arith.constant dense<0.000000e+00> : vector<8x128xf32>
    %104 = tpu.matmul %102, %103, %cst_41 {dimension_numbers = #tpu.dot_dimension_numbers<[1], [0], [0], [1], [0, 0, 1, 1], [], []>} : vector<8x128xbf16>, vector<128x128xbf16>, vector<8x128xf32> -> vector<8x128xf32>
    %105 = arith.addf %101, %104 : vector<8x128xf32>
    %cst_42 = arith.constant 0.000000e+00 : f32
    %106 = vector.broadcast %cst_42 : f32 to vector<8x128xf32>
    %107 = arith.maximumf %105, %106 : vector<8x128xf32>
    %108 = math.tanh %105 : vector<8x128xf32>
    %109 = vector.shape_cast %4 : vector<1x128xi1> to vector<1x128xi1>
    %110 = vector.broadcast %109 : vector<1x128xi1> to vector<8x128xi1>
    %111 = arith.select %110, %107, %108 : vector<8x128xi1>, vector<8x128xf32>
    %112 = tpu.concatenate %34, %45, %56, %67, %78, %89, %100, %111 in 0 : vector<8x128xf32>, vector<8x128xf32>, vector<8x128xf32>, vector<8x128xf32>, vector<8x128xf32>, vector<8x128xf32>, vector<8x128xf32>, vector<8x128xf32> -> vector<64x128xf32>
    %113 = arith.truncf %112 : vector<64x128xf32> to vector<64x128xbf16>
    %c0_43 = arith.constant 0 : index
    %c0_44 = arith.constant 0 : index
    %114 = vector.load %arg5[%c0_43, %c0_44] : memref<128x256xbf16, #tpu.memory_space<vmem>>, vector<128x256xbf16>
    %cst_45 = arith.constant dense<0.000000e+00> : vector<64x256xf32>
    %115 = tpu.matmul %113, %114, %cst_45 {dimension_numbers = #tpu.dot_dimension_numbers<[1], [0], [0], [1], [0, 0, 1, 1], [], []>} : vector<64x128xbf16>, vector<128x256xbf16>, vector<64x256xf32> -> vector<64x256xf32>
    %116 = vector.extract_strided_slice %115 {offsets = [0, 0], sizes = [64, 128], strides = [1, 1]} : vector<64x256xf32> to vector<64x128xf32>
    %cst_46 = arith.constant 0.000000e+00 : f32
    %117 = vector.broadcast %cst_46 : f32 to vector<64x128xf32>
    %118 = arith.maximumf %116, %117 : vector<64x128xf32>
    %119 = vector.extract_strided_slice %115 {offsets = [0, 128], sizes = [64, 128], strides = [1, 1]} : vector<64x256xf32> to vector<64x128xf32>
    %cst_47 = arith.constant 2.000000e+01 : f32
    %120 = vector.broadcast %cst_47 : f32 to vector<64x128xf32>
    %121 = arith.cmpf ogt, %119, %120 : vector<64x128xf32>
    %cst_48 = arith.constant 2.000000e+01 : f32
    %122 = vector.broadcast %cst_48 : f32 to vector<64x128xf32>
    %123 = arith.minimumf %119, %122 : vector<64x128xf32>
    %124 = math.exp %123 : vector<64x128xf32>
    %125 = math.log1p %124 : vector<64x128xf32>
    %126 = arith.select %121, %119, %125 : vector<64x128xi1>, vector<64x128xf32>
    %cst_49 = arith.constant 0.000000e+00 : f32
    %127 = vector.broadcast %cst_49 : f32 to vector<64x128xf32>
    %128 = arith.subf %127, %126 : vector<64x128xf32>
    %129 = arith.mulf %128, %1 : vector<64x128xf32>
    %130 = arith.addf %118, %129 : vector<64x128xf32>
    %131 = arith.addf %1, %130 : vector<64x128xf32>
    %cst_50 = arith.constant 0.000000e+00 : f32
    %132 = vector.broadcast %cst_50 : f32 to vector<64x128xf32>
    %133 = arith.maximumf %131, %132 : vector<64x128xf32>
    %134 = vector.extract_strided_slice %133 {offsets = [56, 0], sizes = [8, 128], strides = [1, 1]} : vector<64x128xf32> to vector<8x128xf32>
    %135 = arith.truncf %134 : vector<8x128xf32> to vector<8x128xbf16>
    %c0_51 = arith.constant 0 : index
    %c0_52 = arith.constant 0 : index
    %136 = vector.load %arg2[%c0_51, %c0_52] : memref<128x128xbf16, #tpu.memory_space<vmem>>, vector<128x128xbf16>
    %cst_53 = arith.constant dense<0.000000e+00> : vector<8x128xf32>
    %137 = tpu.matmul %135, %136, %cst_53 {dimension_numbers = #tpu.dot_dimension_numbers<[1], [0], [0], [1], [0, 0, 1, 1], [], []>} : vector<8x128xbf16>, vector<128x128xbf16>, vector<8x128xf32> -> vector<8x128xf32>
    %cst_54 = arith.constant 0.000000e+00 : f32
    %138 = vector.broadcast %cst_54 : f32 to vector<8x128xf32>
    %139 = arith.maximumf %137, %138 : vector<8x128xf32>
    %cst_55 = arith.constant 2.000000e+01 : f32
    %140 = vector.broadcast %cst_55 : f32 to vector<8x128xf32>
    %141 = arith.cmpf ogt, %137, %140 : vector<8x128xf32>
    %cst_56 = arith.constant 2.000000e+01 : f32
    %142 = vector.broadcast %cst_56 : f32 to vector<8x128xf32>
    %143 = arith.minimumf %137, %142 : vector<8x128xf32>
    %144 = math.exp %143 : vector<8x128xf32>
    %145 = math.log1p %144 : vector<8x128xf32>
    %146 = arith.select %141, %137, %145 : vector<8x128xi1>, vector<8x128xf32>
    %147 = vector.shape_cast %4 : vector<1x128xi1> to vector<1x128xi1>
    %148 = vector.broadcast %147 : vector<1x128xi1> to vector<8x128xi1>
    %149 = arith.select %148, %139, %146 : vector<8x128xi1>, vector<8x128xf32>
    %150 = arith.truncf %149 : vector<8x128xf32> to vector<8x128xbf16>
    %c0_57 = arith.constant 0 : index
    %c0_58 = arith.constant 0 : index
    %151 = vector.load %arg3[%c0_57, %c0_58] : memref<128x128xbf16, #tpu.memory_space<vmem>>, vector<128x128xbf16>
    %cst_59 = arith.constant dense<0.000000e+00> : vector<8x128xf32>
    %152 = tpu.matmul %150, %151, %cst_59 {dimension_numbers = #tpu.dot_dimension_numbers<[1], [0], [0], [1], [0, 0, 1, 1], [], []>} : vector<8x128xbf16>, vector<128x128xbf16>, vector<8x128xf32> -> vector<8x128xf32>
    %153 = arith.truncf %111 : vector<8x128xf32> to vector<8x128xbf16>
    %c0_60 = arith.constant 0 : index
    %c0_61 = arith.constant 0 : index
    %154 = vector.load %arg4[%c0_60, %c0_61] : memref<128x128xbf16, #tpu.memory_space<vmem>>, vector<128x128xbf16>
    %cst_62 = arith.constant dense<0.000000e+00> : vector<8x128xf32>
    %155 = tpu.matmul %153, %154, %cst_62 {dimension_numbers = #tpu.dot_dimension_numbers<[1], [0], [0], [1], [0, 0, 1, 1], [], []>} : vector<8x128xbf16>, vector<128x128xbf16>, vector<8x128xf32> -> vector<8x128xf32>
    %156 = arith.addf %152, %155 : vector<8x128xf32>
    %cst_63 = arith.constant 0.000000e+00 : f32
    %157 = vector.broadcast %cst_63 : f32 to vector<8x128xf32>
    %158 = arith.maximumf %156, %157 : vector<8x128xf32>
    %159 = math.tanh %156 : vector<8x128xf32>
    %160 = vector.shape_cast %4 : vector<1x128xi1> to vector<1x128xi1>
    %161 = vector.broadcast %160 : vector<1x128xi1> to vector<8x128xi1>
    %162 = arith.select %161, %158, %159 : vector<8x128xi1>, vector<8x128xf32>
    %163 = arith.truncf %162 : vector<8x128xf32> to vector<8x128xbf16>
    %c0_64 = arith.constant 0 : index
    %c0_65 = arith.constant 0 : index
    %164 = vector.load %arg5[%c0_64, %c0_65] : memref<128x256xbf16, #tpu.memory_space<vmem>>, vector<128x256xbf16>
    %cst_66 = arith.constant dense<0.000000e+00> : vector<8x256xf32>
    %165 = tpu.matmul %163, %164, %cst_66 {dimension_numbers = #tpu.dot_dimension_numbers<[1], [0], [0], [1], [0, 0, 1, 1], [], []>} : vector<8x128xbf16>, vector<128x256xbf16>, vector<8x256xf32> -> vector<8x256xf32>
    %166 = vector.extract_strided_slice %165 {offsets = [0, 0], sizes = [8, 128], strides = [1, 1]} : vector<8x256xf32> to vector<8x128xf32>
    %cst_67 = arith.constant 0.000000e+00 : f32
    %167 = vector.broadcast %cst_67 : f32 to vector<8x128xf32>
    %168 = arith.maximumf %166, %167 : vector<8x128xf32>
    %169 = vector.extract_strided_slice %165 {offsets = [0, 128], sizes = [8, 128], strides = [1, 1]} : vector<8x256xf32> to vector<8x128xf32>
    %cst_68 = arith.constant 2.000000e+01 : f32
    %170 = vector.broadcast %cst_68 : f32 to vector<8x128xf32>
    %171 = arith.cmpf ogt, %169, %170 : vector<8x128xf32>
    %cst_69 = arith.constant 2.000000e+01 : f32
    %172 = vector.broadcast %cst_69 : f32 to vector<8x128xf32>
    %173 = arith.minimumf %169, %172 : vector<8x128xf32>
    %174 = math.exp %173 : vector<8x128xf32>
    %175 = math.log1p %174 : vector<8x128xf32>
    %176 = arith.select %171, %169, %175 : vector<8x128xi1>, vector<8x128xf32>
    %cst_70 = arith.constant 0.000000e+00 : f32
    %177 = vector.broadcast %cst_70 : f32 to vector<8x128xf32>
    %178 = arith.subf %177, %176 : vector<8x128xf32>
    %179 = arith.mulf %178, %134 : vector<8x128xf32>
    %180 = arith.addf %168, %179 : vector<8x128xf32>
    %181 = arith.addf %134, %180 : vector<8x128xf32>
    %cst_71 = arith.constant 0.000000e+00 : f32
    %182 = vector.broadcast %cst_71 : f32 to vector<8x128xf32>
    %183 = arith.maximumf %181, %182 : vector<8x128xf32>
    %184 = arith.truncf %183 : vector<8x128xf32> to vector<8x128xbf16>
    %c0_72 = arith.constant 0 : index
    %c0_73 = arith.constant 0 : index
    %185 = vector.load %arg2[%c0_72, %c0_73] : memref<128x128xbf16, #tpu.memory_space<vmem>>, vector<128x128xbf16>
    %cst_74 = arith.constant dense<0.000000e+00> : vector<8x128xf32>
    %186 = tpu.matmul %184, %185, %cst_74 {dimension_numbers = #tpu.dot_dimension_numbers<[1], [0], [0], [1], [0, 0, 1, 1], [], []>} : vector<8x128xbf16>, vector<128x128xbf16>, vector<8x128xf32> -> vector<8x128xf32>
    %cst_75 = arith.constant 0.000000e+00 : f32
    %187 = vector.broadcast %cst_75 : f32 to vector<8x128xf32>
    %188 = arith.maximumf %186, %187 : vector<8x128xf32>
    %cst_76 = arith.constant 2.000000e+01 : f32
    %189 = vector.broadcast %cst_76 : f32 to vector<8x128xf32>
    %190 = arith.cmpf ogt, %186, %189 : vector<8x128xf32>
    %cst_77 = arith.constant 2.000000e+01 : f32
    %191 = vector.broadcast %cst_77 : f32 to vector<8x128xf32>
    %192 = arith.minimumf %186, %191 : vector<8x128xf32>
    %193 = math.exp %192 : vector<8x128xf32>
    %194 = math.log1p %193 : vector<8x128xf32>
    %195 = arith.select %190, %186, %194 : vector<8x128xi1>, vector<8x128xf32>
    %196 = vector.shape_cast %4 : vector<1x128xi1> to vector<1x128xi1>
    %197 = vector.broadcast %196 : vector<1x128xi1> to vector<8x128xi1>
    %198 = arith.select %197, %188, %195 : vector<8x128xi1>, vector<8x128xf32>
    %199 = arith.truncf %198 : vector<8x128xf32> to vector<8x128xbf16>
    %c0_78 = arith.constant 0 : index
    %c0_79 = arith.constant 0 : index
    %200 = vector.load %arg3[%c0_78, %c0_79] : memref<128x128xbf16, #tpu.memory_space<vmem>>, vector<128x128xbf16>
    %cst_80 = arith.constant dense<0.000000e+00> : vector<8x128xf32>
    %201 = tpu.matmul %199, %200, %cst_80 {dimension_numbers = #tpu.dot_dimension_numbers<[1], [0], [0], [1], [0, 0, 1, 1], [], []>} : vector<8x128xbf16>, vector<128x128xbf16>, vector<8x128xf32> -> vector<8x128xf32>
    %202 = arith.truncf %162 : vector<8x128xf32> to vector<8x128xbf16>
    %c0_81 = arith.constant 0 : index
    %c0_82 = arith.constant 0 : index
    %203 = vector.load %arg4[%c0_81, %c0_82] : memref<128x128xbf16, #tpu.memory_space<vmem>>, vector<128x128xbf16>
    %cst_83 = arith.constant dense<0.000000e+00> : vector<8x128xf32>
    %204 = tpu.matmul %202, %203, %cst_83 {dimension_numbers = #tpu.dot_dimension_numbers<[1], [0], [0], [1], [0, 0, 1, 1], [], []>} : vector<8x128xbf16>, vector<128x128xbf16>, vector<8x128xf32> -> vector<8x128xf32>
    %205 = arith.addf %201, %204 : vector<8x128xf32>
    %cst_84 = arith.constant 0.000000e+00 : f32
    %206 = vector.broadcast %cst_84 : f32 to vector<8x128xf32>
    %207 = arith.maximumf %205, %206 : vector<8x128xf32>
    %208 = math.tanh %205 : vector<8x128xf32>
    %209 = vector.shape_cast %4 : vector<1x128xi1> to vector<1x128xi1>
    %210 = vector.broadcast %209 : vector<1x128xi1> to vector<8x128xi1>
    %211 = arith.select %210, %207, %208 : vector<8x128xi1>, vector<8x128xf32>
    %212 = arith.truncf %211 : vector<8x128xf32> to vector<8x128xbf16>
    %c0_85 = arith.constant 0 : index
    %c0_86 = arith.constant 0 : index
    %213 = vector.load %arg5[%c0_85, %c0_86] : memref<128x256xbf16, #tpu.memory_space<vmem>>, vector<128x256xbf16>
    %cst_87 = arith.constant dense<0.000000e+00> : vector<8x256xf32>
    %214 = tpu.matmul %212, %213, %cst_87 {dimension_numbers = #tpu.dot_dimension_numbers<[1], [0], [0], [1], [0, 0, 1, 1], [], []>} : vector<8x128xbf16>, vector<128x256xbf16>, vector<8x256xf32> -> vector<8x256xf32>
    %215 = vector.extract_strided_slice %214 {offsets = [0, 0], sizes = [8, 128], strides = [1, 1]} : vector<8x256xf32> to vector<8x128xf32>
    %cst_88 = arith.constant 0.000000e+00 : f32
    %216 = vector.broadcast %cst_88 : f32 to vector<8x128xf32>
    %217 = arith.maximumf %215, %216 : vector<8x128xf32>
    %218 = vector.extract_strided_slice %214 {offsets = [0, 128], sizes = [8, 128], strides = [1, 1]} : vector<8x256xf32> to vector<8x128xf32>
    %cst_89 = arith.constant 2.000000e+01 : f32
    %219 = vector.broadcast %cst_89 : f32 to vector<8x128xf32>
    %220 = arith.cmpf ogt, %218, %219 : vector<8x128xf32>
    %cst_90 = arith.constant 2.000000e+01 : f32
    %221 = vector.broadcast %cst_90 : f32 to vector<8x128xf32>
    %222 = arith.minimumf %218, %221 : vector<8x128xf32>
    %223 = math.exp %222 : vector<8x128xf32>
    %224 = math.log1p %223 : vector<8x128xf32>
    %225 = arith.select %220, %218, %224 : vector<8x128xi1>, vector<8x128xf32>
    %cst_91 = arith.constant 0.000000e+00 : f32
    %226 = vector.broadcast %cst_91 : f32 to vector<8x128xf32>
    %227 = arith.subf %226, %225 : vector<8x128xf32>
    %228 = arith.mulf %227, %183 : vector<8x128xf32>
    %229 = arith.addf %217, %228 : vector<8x128xf32>
    %230 = arith.addf %183, %229 : vector<8x128xf32>
    %cst_92 = arith.constant 0.000000e+00 : f32
    %231 = vector.broadcast %cst_92 : f32 to vector<8x128xf32>
    %232 = arith.maximumf %230, %231 : vector<8x128xf32>
    %233 = tpu.concatenate %130, %180, %229 in 0 : vector<64x128xf32>, vector<8x128xf32>, vector<8x128xf32> -> vector<80x128xf32>
    %234 = tpu.concatenate %133, %183, %232 in 0 : vector<64x128xf32>, vector<8x128xf32>, vector<8x128xf32> -> vector<80x128xf32>
    %235 = tpu.concatenate %128, %178, %227 in 0 : vector<64x128xf32>, vector<8x128xf32>, vector<8x128xf32> -> vector<80x128xf32>
    %236 = tpu.concatenate %112, %162, %211 in 0 : vector<64x128xf32>, vector<8x128xf32>, vector<8x128xf32> -> vector<80x128xf32>
    %c0_93 = arith.constant 0 : index
    %c0_94 = arith.constant 0 : index
    %c0_95 = arith.constant 0 : index
    %237 = vector.load %arg6[%c0_93, %c0_94, %c0_95] : memref<1x80x128xf32, #tpu.memory_space<vmem>>, vector<1x80x128xf32>
    %238 = vector.shape_cast %237 : vector<1x80x128xf32> to vector<80x128xf32>
    %239 = vector.shape_cast %233 : vector<80x128xf32> to vector<1x80x128xf32>
    tpu.vector_store %arg6[%c0_93, %c0_94, %c0_95], %239 {strides = array<i32>} : memref<1x80x128xf32, #tpu.memory_space<vmem>>, vector<1x80x128xf32>,
    %c0_96 = arith.constant 0 : index
    %c0_97 = arith.constant 0 : index
    %c0_98 = arith.constant 0 : index
    %240 = vector.load %arg7[%c0_96, %c0_97, %c0_98] : memref<1x80x128xf32, #tpu.memory_space<vmem>>, vector<1x80x128xf32>
    %241 = vector.shape_cast %240 : vector<1x80x128xf32> to vector<80x128xf32>
    %242 = vector.shape_cast %234 : vector<80x128xf32> to vector<1x80x128xf32>
    tpu.vector_store %arg7[%c0_96, %c0_97, %c0_98], %242 {strides = array<i32>} : memref<1x80x128xf32, #tpu.memory_space<vmem>>, vector<1x80x128xf32>,
    %c0_99 = arith.constant 0 : index
    %c0_100 = arith.constant 0 : index
    %c0_101 = arith.constant 0 : index
    %243 = vector.load %arg8[%c0_99, %c0_100, %c0_101] : memref<1x80x128xf32, #tpu.memory_space<vmem>>, vector<1x80x128xf32>
    %244 = vector.shape_cast %243 : vector<1x80x128xf32> to vector<80x128xf32>
    %245 = vector.shape_cast %235 : vector<80x128xf32> to vector<1x80x128xf32>
    tpu.vector_store %arg8[%c0_99, %c0_100, %c0_101], %245 {strides = array<i32>} : memref<1x80x128xf32, #tpu.memory_space<vmem>>, vector<1x80x128xf32>,
    %c0_102 = arith.constant 0 : index
    %c0_103 = arith.constant 0 : index
    %c0_104 = arith.constant 0 : index
    %246 = vector.load %arg9[%c0_102, %c0_103, %c0_104] : memref<1x80x128xf32, #tpu.memory_space<vmem>>, vector<1x80x128xf32>
    %247 = vector.shape_cast %246 : vector<1x80x128xf32> to vector<80x128xf32>
    %248 = vector.shape_cast %236 : vector<80x128xf32> to vector<1x80x128xf32>
    tpu.vector_store %arg9[%c0_102, %c0_103, %c0_104], %248 {strides = array<i32>} : memref<1x80x128xf32, #tpu.memory_space<vmem>>, vector<1x80x128xf32>,
    return
  }
  func.func @transform_0(%arg0: i32) -> (i32, i32, i32) {
    %c0_i32 = arith.constant 0 : i32
    %c0_i32_0 = arith.constant 0 : i32
    %c0_i32_1 = arith.constant 0 : i32
    return %arg0, %c0_i32, %c0_i32_0 : i32, i32, i32
  }
  func.func @transform_1(%arg0: i32) -> (i32, i32) {
    %c0_i32 = arith.constant 0 : i32
    %c0_i32_0 = arith.constant 0 : i32
    %c0_i32_1 = arith.constant 0 : i32
    return %c0_i32, %c0_i32_0 : i32, i32
  }
  func.func @transform_2(%arg0: i32) -> (i32, i32) {
    %c0_i32 = arith.constant 0 : i32
    %c0_i32_0 = arith.constant 0 : i32
    %c0_i32_1 = arith.constant 0 : i32
    return %c0_i32, %c0_i32_0 : i32, i32
  }
  func.func @transform_3(%arg0: i32) -> (i32, i32) {
    %c0_i32 = arith.constant 0 : i32
    %c0_i32_0 = arith.constant 0 : i32
    %c0_i32_1 = arith.constant 0 : i32
    return %c0_i32, %c0_i32_0 : i32, i32
  }
  func.func @transform_4(%arg0: i32) -> (i32, i32) {
    %c0_i32 = arith.constant 0 : i32
    %c0_i32_0 = arith.constant 0 : i32
    %c0_i32_1 = arith.constant 0 : i32
    return %c0_i32, %c0_i32_0 : i32, i32
  }
  func.func @transform_5(%arg0: i32) -> (i32, i32, i32) {
    %c0_i32 = arith.constant 0 : i32
    %c0_i32_0 = arith.constant 0 : i32
    %c0_i32_1 = arith.constant 0 : i32
    return %arg0, %c0_i32, %c0_i32_0 : i32, i32, i32
  }
  func.func @transform_6(%arg0: i32) -> (i32, i32, i32) {
    %c0_i32 = arith.constant 0 : i32
    %c0_i32_0 = arith.constant 0 : i32
    %c0_i32_1 = arith.constant 0 : i32
    return %arg0, %c0_i32, %c0_i32_0 : i32, i32, i32
  }
  func.func @transform_7(%arg0: i32) -> (i32, i32, i32) {
    %c0_i32 = arith.constant 0 : i32
    %c0_i32_0 = arith.constant 0 : i32
    %c0_i32_1 = arith.constant 0 : i32
    return %arg0, %c0_i32, %c0_i32_0 : i32, i32, i32
  }
  func.func @transform_8(%arg0: i32) -> (i32, i32, i32) {
    %c0_i32 = arith.constant 0 : i32
    %c0_i32_0 = arith.constant 0 : i32
    %c0_i32_1 = arith.constant 0 : i32
    return %arg0, %c0_i32, %c0_i32_0 : i32, i32, i32
  }
}

</mosaic_0001>

<llo_original>
// kernel: supirfactor_biophysical_forward.1
$region0: #{supirfactor_biophysical_forward.1}
  #allocation0 [shape = 'u32[]', space=smem, size = 0x4, offset = 0x4, fixed_abs, tag = 'smem constant byte address 0x4 - core index']
  #allocation1 [shape = 'u32[144,128]{1,0:T(1,128)}', space=vmem, size = 0x12000, scoped, tag = 'internal scratch']
  %s0 = inlined_call_operand.vmem [shape: f32[1,64,128], index: 0, kind: input, shape index: {}]
  %s1 = inlined_call_operand.vmem [shape: bf16[128,128], index: 1, kind: input, shape index: {}]
  %s2 = inlined_call_operand.vmem [shape: bf16[128,128], index: 2, kind: input, shape index: {}]
  %s3 = inlined_call_operand.vmem [shape: bf16[128,128], index: 3, kind: input, shape index: {}]
  %s4 = inlined_call_operand.vmem [shape: bf16[128,256], index: 4, kind: input, shape index: {}]
  %s5 = inlined_call_operand.vmem [shape: f32[1,80,128], index: 5, kind: output, shape index: {0}]
  %s6 = inlined_call_operand.vmem [shape: f32[1,80,128], index: 6, kind: output, shape index: {1}]
  %s7 = inlined_call_operand.vmem [shape: f32[1,80,128], index: 7, kind: output, shape index: {2}]
  %s8 = inlined_call_operand.vmem [shape: f32[1,80,128], index: 8, kind: output, shape index: {3}]
  %9 = xla_tuple %s5, %s6, %s7, %s8
  %s10 = sld [smem:[#allocation0]]
  $region54: #{supirfactor_biophysical_forward.1} parent=0
    _
  %s12 = ssub.s32 1, %s10
  %s13 = scalar_select 0, %s12, %s10
  // Predicated region
  $region2: #{supirfactor_biophysical_forward.1} parent=0 // pred_check
    _
  $region3: #{supirfactor_biophysical_forward.1} parent=0 // pred_check_branch
    %15 = sbr.rel (0) target = $region5
  $region4: #{supirfactor_biophysical_forward.1} parent=0 // pred_region
    _
  $region5: #{supirfactor_biophysical_forward.1} parent=0 // pred_fallthru
    _
  // Predicated region
  $region6: #{supirfactor_biophysical_forward.1} parent=0 // pred_check
    _
  $region7: #{supirfactor_biophysical_forward.1} parent=0 // pred_check_branch
    %17 = sbr.rel (0) target = $region9
  $region8: #{supirfactor_biophysical_forward.1} parent=0 // pred_region
    _
  $region9: #{supirfactor_biophysical_forward.1} parent=0 // pred_fallthru
    _
  // Predicated region
  $region10: #{supirfactor_biophysical_forward.1} parent=0 // pred_check
    _
  $region11: #{supirfactor_biophysical_forward.1} parent=0 // pred_check_branch
    %19 = sbr.rel (0) target = $region13
  $region12: #{supirfactor_biophysical_forward.1} parent=0 // pred_region
    _
  $region13: #{supirfactor_biophysical_forward.1} parent=0 // pred_fallthru
    _
  // Predicated region
  $region14: #{supirfactor_biophysical_forward.1} parent=0 // pred_check
    _
  $region15: #{supirfactor_biophysical_forward.1} parent=0 // pred_check_branch
    %21 = sbr.rel (0) target = $region17
  $region16: #{supirfactor_biophysical_forward.1} parent=0 // pred_region
    _
  $region17: #{supirfactor_biophysical_forward.1} parent=0 // pred_fallthru
    _
  // Predicated region
  $region18: #{supirfactor_biophysical_forward.1} parent=0 // pred_check
    _
  $region19: #{supirfactor_biophysical_forward.1} parent=0 // pred_check_branch
    %23 = sbr.rel (0) target = $region21
  $region20: #{supirfactor_biophysical_forward.1} parent=0 // pred_region
    _
  $region21: #{supirfactor_biophysical_forward.1} parent=0 // pred_fallthru
    _
  %v25 = vld [vmem:[%s0] sm:$0xff]
  %v26 = vld [vmem:[%s0 + $0x8] sm:$0xff]
  %v27 = vld [vmem:[%s0 + $0x10] sm:$0xff]
  %v28 = vld [vmem:[%s0 + $0x18] sm:$0xff]
  %v29 = vld [vmem:[%s0 + $0x20] sm:$0xff]
  %v30 = vld [vmem:[%s0 + $0x28] sm:$0xff]
  %v31 = vld [vmem:[%s0 + $0x30] sm:$0xff]
  %v32 = vld [vmem:[%s0 + $0x38] sm:$0xff]
  %v33 = vlaneseq
  %v34 = vand.u32 %v33, 127
  %vm35 = vcmp.lt.s32.totalorder %v34, 64
  %v36 = vpack.c.bf16 %v26, %v25
  %v37 = vpack.c.bf16 %v28, %v27
  %v38 = vpack.c.bf16 %v30, %v29
  %v39 = vpack.c.bf16 %v32, %v31
  %v40 = vld [vmem:[%s1] sm:$0xf]
  %v41 = vld [vmem:[%s1 + $0x4] sm:$0xf]
  %v42 = vld [vmem:[%s1 + $0x8] sm:$0xf]
  %v43 = vld [vmem:[%s1 + $0xc] sm:$0xf]
  %v44 = vld [vmem:[%s1 + $0x10] sm:$0xf]
  %v45 = vld [vmem:[%s1 + $0x14] sm:$0xf]
  %v46 = vld [vmem:[%s1 + $0x18] sm:$0xf]
  %v47 = vld [vmem:[%s1 + $0x1c] sm:$0xf]
  %v48 = vld [vmem:[%s1 + $0x20] sm:$0xf]
  %v49 = vld [vmem:[%s1 + $0x24] sm:$0xf]
  %v50 = vld [vmem:[%s1 + $0x28] sm:$0xf]
  %v51 = vld [vmem:[%s1 + $0x2c] sm:$0xf]
  %v52 = vld [vmem:[%s1 + $0x30] sm:$0xf]
  %v53 = vld [vmem:[%s1 + $0x34] sm:$0xf]
  %v54 = vld [vmem:[%s1 + $0x38] sm:$0xf]
  %v55 = vld [vmem:[%s1 + $0x3c] sm:$0xf]
  %v72 = vunpack.c.l.b16 %v40
  %v73 = vunpack.c.l.b16 %v41
  %v74 = vunpack.c.l.b16 %v42
  %v75 = vunpack.c.l.b16 %v43
  %v76 = vunpack.c.l.b16 %v44
  %v77 = vunpack.c.l.b16 %v45
  %v78 = vunpack.c.l.b16 %v46
  %v79 = vunpack.c.l.b16 %v47
  %v80 = vunpack.c.l.b16 %v48
  %v81 = vunpack.c.l.b16 %v49
  %v82 = vunpack.c.l.b16 %v50
  %v83 = vunpack.c.l.b16 %v51
  %v84 = vunpack.c.l.b16 %v52
  %v85 = vunpack.c.l.b16 %v53
  %v86 = vunpack.c.l.b16 %v54
  %v87 = vunpack.c.l.b16 %v55
  %v88 = vpack.c.b16 %v73, %v72
  %v89 = vpack.c.b16 %v75, %v74
  %v90 = vpack.c.b16 %v77, %v76
  %v91 = vpack.c.b16 %v79, %v78
  %v92 = vpack.c.b16 %v81, %v80
  %v93 = vpack.c.b16 %v83, %v82
  %v94 = vpack.c.b16 %v85, %v84
  %v95 = vpack.c.b16 %v87, %v86
  %104 = vmatprep.subr.bf16.mxu0 0
  %105 = vmatpush1.bf16.msra.mxu0 %v88
  %106 = vmatprep.subr.bf16.mxu0 0
  %107 = vmatpush1.bf16.msra.mxu0 %v89
  %108 = vmatprep.subr.bf16.mxu0 0
  %109 = vmatpush1.bf16.msra.mxu0 %v90
  %110 = vmatprep.subr.bf16.mxu0 0
  %111 = vmatpush1.bf16.msra.mxu0 %v91
  %112 = vmatprep.subr.bf16.mxu0 0
  %113 = vmatpush1.bf16.msra.mxu0 %v92
  %114 = vmatprep.subr.bf16.mxu0 0
  %115 = vmatpush1.bf16.msra.mxu0 %v93
  %116 = vmatprep.subr.bf16.mxu0 0
  %117 = vmatpush1.bf16.msra.mxu0 %v94
  %118 = vmatprep.subr.bf16.mxu0 0
  %119 = vmatpush1.bf16.msra.mxu0 %v95
  %120 = vmatprep.subr.bf16.mxu0 0
  %121 = vmatpush1.bf16.msra.mxu0 0
  %122 = vmatprep.subr.bf16.mxu0 0
  %123 = vmatpush1.bf16.msra.mxu0 0
  %124 = vmatprep.subr.bf16.mxu0 0
  %125 = vmatpush1.bf16.msra.mxu0 0
  %126 = vmatprep.subr.bf16.mxu0 0
  %127 = vmatpush1.bf16.msra.mxu0 0
  %128 = vmatprep.subr.bf16.mxu0 0
  %129 = vmatpush1.bf16.msra.mxu0 0
  %130 = vmatprep.subr.bf16.mxu0 0
  %131 = vmatpush1.bf16.msra.mxu0 0
  %132 = vmatprep.subr.bf16.mxu0 0
  %133 = vmatpush1.bf16.msra.mxu0 0
  %134 = vmatprep.subr.bf16.mxu0 0
  %135 = vmatpush1.bf16.msra.mxu0 0
  %136 = vmatprep.mubr.bf16.mxu0 0
  %137 = vmatmul.mubr.bf16.gmra.mrb[0].mxu0 %v36
  %v138 = vpop.f32.mrb[0].mxu0
  %v139 = vadd.f32 0.0, %v138
  %v140 = vpop.f32.mrb[0].mxu0
  %v141 = vpop.f32.mrb[0].mxu0
  %v142 = vadd.f32 0.0, %v141
  %v143 = vpop.f32.mrb[0].mxu0
  %144 = vmatprep.mubr.bf16.mxu0 0
  %145 = vmatmul.mubr.bf16.gmra.mrb[0].mxu0 %v37
  %v146 = vpop.f32.mrb[0].mxu0
  %v147 = vadd.f32 0.0, %v146
  %v148 = vpop.f32.mrb[0].mxu0
  %v149 = vpop.f32.mrb[0].mxu0
  %v150 = vadd.f32 0.0, %v149
  %v151 = vpop.f32.mrb[0].mxu0
  %152 = vmatprep.mubr.bf16.mxu0 0
  %153 = vmatmul.mubr.bf16.gmra.mrb[0].mxu0 %v38
  %v154 = vpop.f32.mrb[0].mxu0
  %v155 = vadd.f32 0.0, %v154
  %v156 = vpop.f32.mrb[0].mxu0
  %v157 = vpop.f32.mrb[0].mxu0
  %v158 = vadd.f32 0.0, %v157
  %v159 = vpop.f32.mrb[0].mxu0
  %160 = vmatprep.mubr.bf16.mxu0 0
  %161 = vmatmul.mubr.bf16.gmra.mrb[0].mxu0 %v39
  %v162 = vpop.f32.mrb[0].mxu0
  %v163 = vadd.f32 0.0, %v162
  %v164 = vpop.f32.mrb[0].mxu0
  %v165 = vpop.f32.mrb[0].mxu0
  %v166 = vadd.f32 0.0, %v165
  %v167 = vpop.f32.mrb[0].mxu0
  %168 = vdwg.mxu0
  %v169 = vmax.f32 %v139, 0.0
  %v170 = vmax.f32 %v142, 0.0
  %v171 = vmax.f32 %v147, 0.0
  %v172 = vmax.f32 %v150, 0.0
  %v173 = vmax.f32 %v155, 0.0
  %v174 = vmax.f32 %v158, 0.0
  %v175 = vmax.f32 %v163, 0.0
  %v176 = vmax.f32 %v166, 0.0
  %vm177 = vcmp.gt.f32.partialorder %v139, 20.0
  %vm178 = vcmp.gt.f32.partialorder %v142, 20.0
  %vm179 = vcmp.gt.f32.partialorder %v147, 20.0
  %vm180 = vcmp.gt.f32.partialorder %v150, 20.0
  %vm181 = vcmp.gt.f32.partialorder %v155, 20.0
  %vm182 = vcmp.gt.f32.partialorder %v158, 20.0
  %vm183 = vcmp.gt.f32.partialorder %v163, 20.0
  %vm184 = vcmp.gt.f32.partialorder %v166, 20.0
  %v185 = vmin.f32 %v139, 20.0
  %v186 = vmin.f32 %v142, 20.0
  %v187 = vmin.f32 %v147, 20.0
  %v188 = vmin.f32 %v150, 20.0
  %v189 = vmin.f32 %v155, 20.0
  %v190 = vmin.f32 %v158, 20.0
  %v191 = vmin.f32 %v163, 20.0
  %v192 = vmin.f32 %v166, 20.0
  %v193 = vmul.f32 %v185, 1.442695
  %v194 = vpow.pop %v193
  %v195 = vmul.f32 %v186, 1.442695
  %v196 = vpow.pop %v195
  %v197 = vmul.f32 %v187, 1.442695
  %v198 = vpow.pop %v197
  %v199 = vmul.f32 %v188, 1.442695
  %v200 = vpow.pop %v199
  %v201 = vmul.f32 %v189, 1.442695
  %v202 = vpow.pop %v201
  %v203 = vmul.f32 %v190, 1.442695
  %v204 = vpow.pop %v203
  %v205 = vmul.f32 %v191, 1.442695
  %v206 = vpow.pop %v205
  %v207 = vmul.f32 %v192, 1.442695
  %v208 = vpow.pop %v207
  %v209 = vadd.f32 %v194, 1.0
  %v210 = vlog2.pop %v209
  %v211 = vmul.f32 %v210, 0.6931472
  %v212 = vmul.f32 -0.5, %v194
  %v213 = vadd.f32 %v212, 1.0
  %v214 = vmul.f32 %v213, %v194
  %v215 = vand.u32 2147483647, %v194
  %vm216 = vcmp.lt.f32.partialorder %v215, 0.0004427343
  %v217 = vsel %vm216, %v214, %v211
  %v218 = vadd.f32 %v196, 1.0
  %v219 = vlog2.pop %v218
  %v220 = vmul.f32 %v219, 0.6931472
  %v221 = vmul.f32 -0.5, %v196
  %v222 = vadd.f32 %v221, 1.0
  %v223 = vmul.f32 %v222, %v196
  %v224 = vand.u32 2147483647, %v196
  %vm225 = vcmp.lt.f32.partialorder %v224, 0.0004427343
  %v226 = vsel %vm225, %v223, %v220
  %v227 = vadd.f32 %v198, 1.0
  %v228 = vlog2.pop %v227
  %v229 = vmul.f32 %v228, 0.6931472
  %v230 = vmul.f32 -0.5, %v198
  %v231 = vadd.f32 %v230, 1.0
  %v232 = vmul.f32 %v231, %v198
  %v233 = vand.u32 2147483647, %v198
  %vm234 = vcmp.lt.f32.partialorder %v233, 0.0004427343
  %v235 = vsel %vm234, %v232, %v229
  %v236 = vadd.f32 %v200, 1.0
  %v237 = vlog2.pop %v236
  %v238 = vmul.f32 %v237, 0.6931472
  %v239 = vmul.f32 -0.5, %v200
  %v240 = vadd.f32 %v239, 1.0
  %v241 = vmul.f32 %v240, %v200
  %v242 = vand.u32 2147483647, %v200
  %vm243 = vcmp.lt.f32.partialorder %v242, 0.0004427343
  %v244 = vsel %vm243, %v241, %v238
  %v245 = vadd.f32 %v202, 1.0
  %v246 = vlog2.pop %v245
  %v247 = vmul.f32 %v246, 0.6931472
  %v248 = vmul.f32 -0.5, %v202
  %v249 = vadd.f32 %v248, 1.0
  %v250 = vmul.f32 %v249, %v202
  %v251 = vand.u32 2147483647, %v202
  %vm252 = vcmp.lt.f32.partialorder %v251, 0.0004427343
  %v253 = vsel %vm252, %v250, %v247
  %v254 = vadd.f32 %v204, 1.0
  %v255 = vlog2.pop %v254
  %v256 = vmul.f32 %v255, 0.6931472
  %v257 = vmul.f32 -0.5, %v204
  %v258 = vadd.f32 %v257, 1.0
  %v259 = vmul.f32 %v258, %v204
  %v260 = vand.u32 2147483647, %v204
  %vm261 = vcmp.lt.f32.partialorder %v260, 0.0004427343
  %v262 = vsel %vm261, %v259, %v256
  %v263 = vadd.f32 %v206, 1.0
  %v264 = vlog2.pop %v263
  %v265 = vmul.f32 %v264, 0.6931472
  %v266 = vmul.f32 -0.5, %v206
  %v267 = vadd.f32 %v266, 1.0
  %v268 = vmul.f32 %v267, %v206
  %v269 = vand.u32 2147483647, %v206
  %vm270 = vcmp.lt.f32.partialorder %v269, 0.0004427343
  %v271 = vsel %vm270, %v268, %v265
  %v272 = vadd.f32 %v208, 1.0
  %v273 = vlog2.pop %v272
  %v274 = vmul.f32 %v273, 0.6931472
  %v275 = vmul.f32 -0.5, %v208
  %v276 = vadd.f32 %v275, 1.0
  %v277 = vmul.f32 %v276, %v208
  %v278 = vand.u32 2147483647, %v208
  %vm279 = vcmp.lt.f32.partialorder %v278, 0.0004427343
  %v280 = vsel %vm279, %v277, %v274
  %v281 = vsel %vm177, %v139, %v217
  %v282 = vsel %vm178, %v142, %v226
  %v283 = vsel %vm179, %v147, %v235
  %v284 = vsel %vm180, %v150, %v244
  %v285 = vsel %vm181, %v155, %v253
  %v286 = vsel %vm182, %v158, %v262
  %v287 = vsel %vm183, %v163, %v271
  %v288 = vsel %vm184, %v166, %v280
  %v289 = vsel %vm35, 1, 0
  %vm290 = vcmp.eq.s32.totalorder %v289, 1
  %v291 = vsel %vm290, %v169, %v281
  %v292 = vsel %vm290, %v170, %v282
  %v293 = vsel %vm290, %v171, %v283
  %v294 = vsel %vm290, %v172, %v284
  %v295 = vsel %vm290, %v173, %v285
  %v296 = vsel %vm290, %v174, %v286
  %v297 = vsel %vm290, %v175, %v287
  %v298 = vsel %vm290, %v176, %v288
  %v299 = vpack.c.bf16 %v292, %v291
  %v300 = vpack.c.bf16 %v294, %v293
  %v301 = vpack.c.bf16 %v296, %v295
  %v302 = vpack.c.bf16 %v298, %v297
  %v303 = vld [vmem:[%s2] sm:$0xf]
  %v304 = vld [vmem:[%s2 + $0x4] sm:$0xf]
  %v305 = vld [vmem:[%s2 + $0x8] sm:$0xf]
  %v306 = vld [vmem:[%s2 + $0xc] sm:$0xf]
  %v307 = vld [vmem:[%s2 + $0x10] sm:$0xf]
  %v308 = vld [vmem:[%s2 + $0x14] sm:$0xf]
  %v309 = vld [vmem:[%s2 + $0x18] sm:$0xf]
  %v310 = vld [vmem:[%s2 + $0x1c] sm:$0xf]
  %v311 = vld [vmem:[%s2 + $0x20] sm:$0xf]
  %v312 = vld [vmem:[%s2 + $0x24] sm:$0xf]
  %v313 = vld [vmem:[%s2 + $0x28] sm:$0xf]
  %v314 = vld [vmem:[%s2 + $0x2c] sm:$0xf]
  %v315 = vld [vmem:[%s2 + $0x30] sm:$0xf]
  %v316 = vld [vmem:[%s2 + $0x34] sm:$0xf]
  %v317 = vld [vmem:[%s2 + $0x38] sm:$0xf]
  %v318 = vld [vmem:[%s2 + $0x3c] sm:$0xf]
  %v335 = vunpack.c.l.b16 %v303
  %v336 = vunpack.c.l.b16 %v304
  %v337 = vunpack.c.l.b16 %v305
  %v338 = vunpack.c.l.b16 %v306
  %v339 = vunpack.c.l.b16 %v307
  %v340 = vunpack.c.l.b16 %v308
  %v341 = vunpack.c.l.b16 %v309
  %v342 = vunpack.c.l.b16 %v310
  %v343 = vunpack.c.l.b16 %v311
  %v344 = vunpack.c.l.b16 %v312
  %v345 = vunpack.c.l.b16 %v313
  %v346 = vunpack.c.l.b16 %v314
  %v347 = vunpack.c.l.b16 %v315
  %v348 = vunpack.c.l.b16 %v316
  %v349 = vunpack.c.l.b16 %v317
  %v350 = vunpack.c.l.b16 %v318
  %v351 = vpack.c.b16 %v336, %v335
  %v352 = vpack.c.b16 %v338, %v337
  %v353 = vpack.c.b16 %v340, %v339
  %v354 = vpack.c.b16 %v342, %v341
  %v355 = vpack.c.b16 %v344, %v343
  %v356 = vpack.c.b16 %v346, %v345
  %v357 = vpack.c.b16 %v348, %v347
  %v358 = vpack.c.b16 %v350, %v349
  %367 = vmatprep.subr.bf16.mxu0 0
  %368 = vmatpush1.bf16.msra.mxu0 %v351
  %369 = vmatprep.subr.bf16.mxu0 0
  %370 = vmatpush1.bf16.msra.mxu0 %v352
  %371 = vmatprep.subr.bf16.mxu0 0
  %372 = vmatpush1.bf16.msra.mxu0 %v353
  %373 = vmatprep.subr.bf16.mxu0 0
  %374 = vmatpush1.bf16.msra.mxu0 %v354
  %375 = vmatprep.subr.bf16.mxu0 0
  %376 = vmatpush1.bf16.msra.mxu0 %v355
  %377 = vmatprep.subr.bf16.mxu0 0
  %378 = vmatpush1.bf16.msra.mxu0 %v356
  %379 = vmatprep.subr.bf16.mxu0 0
  %380 = vmatpush1.bf16.msra.mxu0 %v357
  %381 = vmatprep.subr.bf16.mxu0 0
  %382 = vmatpush1.bf16.msra.mxu0 %v358
  %383 = vmatprep.subr.bf16.mxu0 0
  %384 = vmatpush1.bf16.msra.mxu0 0
  %385 = vmatprep.subr.bf16.mxu0 0
  %386 = vmatpush1.bf16.msra.mxu0 0
  %387 = vmatprep.subr.bf16.mxu0 0
  %388 = vmatpush1.bf16.msra.mxu0 0
  %389 = vmatprep.subr.bf16.mxu0 0
  %390 = vmatpush1.bf16.msra.mxu0 0
  %391 = vmatprep.subr.bf16.mxu0 0
  %392 = vmatpush1.bf16.msra.mxu0 0
  %393 = vmatprep.subr.bf16.mxu0 0
  %394 = vmatpush1.bf16.msra.mxu0 0
  %395 = vmatprep.subr.bf16.mxu0 0
  %396 = vmatpush1.bf16.msra.mxu0 0
  %397 = vmatprep.subr.bf16.mxu0 0
  %398 = vmatpush1.bf16.msra.mxu0 0
  %399 = vmatprep.mubr.bf16.mxu0 0
  %400 = vmatmul.mubr.bf16.gmra.mrb[0].mxu0 %v299
  %v401 = vpop.f32.mrb[0].mxu0
  %v402 = vadd.f32 0.0, %v401
  %v403 = vpop.f32.mrb[0].mxu0
  %v404 = vpop.f32.mrb[0].mxu0
  %v405 = vadd.f32 0.0, %v404
  %v406 = vpop.f32.mrb[0].mxu0
  %407 = vmatprep.mubr.bf16.mxu0 0
  %408 = vmatmul.mubr.bf16.gmra.mrb[0].mxu0 %v300
  %v409 = vpop.f32.mrb[0].mxu0
  %v410 = vadd.f32 0.0, %v409
  %v411 = vpop.f32.mrb[0].mxu0
  %v412 = vpop.f32.mrb[0].mxu0
  %v413 = vadd.f32 0.0, %v412
  %v414 = vpop.f32.mrb[0].mxu0
  %415 = vmatprep.mubr.bf16.mxu0 0
  %416 = vmatmul.mubr.bf16.gmra.mrb[0].mxu0 %v301
  %v417 = vpop.f32.mrb[0].mxu0
  %v418 = vadd.f32 0.0, %v417
  %v419 = vpop.f32.mrb[0].mxu0
  %v420 = vpop.f32.mrb[0].mxu0
  %v421 = vadd.f32 0.0, %v420
  %v422 = vpop.f32.mrb[0].mxu0
  %423 = vmatprep.mubr.bf16.mxu0 0
  %424 = vmatmul.mubr.bf16.gmra.mrb[0].mxu0 %v302
  %v425 = vpop.f32.mrb[0].mxu0
  %v426 = vadd.f32 0.0, %v425
  %v427 = vpop.f32.mrb[0].mxu0
  %v428 = vpop.f32.mrb[0].mxu0
  %v429 = vadd.f32 0.0, %v428
  %v430 = vpop.f32.mrb[0].mxu0
  %431 = vdwg.mxu0
  %v432 = vld [vmem:[%s3] sm:$0xf]
  %v433 = vld [vmem:[%s3 + $0x4] sm:$0xf]
  %v434 = vld [vmem:[%s3 + $0x8] sm:$0xf]
  %v435 = vld [vmem:[%s3 + $0xc] sm:$0xf]
  %v436 = vld [vmem:[%s3 + $0x10] sm:$0xf]
  %v437 = vld [vmem:[%s3 + $0x14] sm:$0xf]
  %v438 = vld [vmem:[%s3 + $0x18] sm:$0xf]
  %v439 = vld [vmem:[%s3 + $0x1c] sm:$0xf]
  %v440 = vld [vmem:[%s3 + $0x20] sm:$0xf]
  %v441 = vld [vmem:[%s3 + $0x24] sm:$0xf]
  %v442 = vld [vmem:[%s3 + $0x28] sm:$0xf]
  %v443 = vld [vmem:[%s3 + $0x2c] sm:$0xf]
  %v444 = vld [vmem:[%s3 + $0x30] sm:$0xf]
  %v445 = vld [vmem:[%s3 + $0x34] sm:$0xf]
  %v446 = vld [vmem:[%s3 + $0x38] sm:$0xf]
  %v447 = vld [vmem:[%s3 + $0x3c] sm:$0xf]
  %v464 = vunpack.c.l.b16 %v432
  %v465 = vunpack.c.l.b16 %v433
  %v466 = vunpack.c.l.b16 %v434
  %v467 = vunpack.c.l.b16 %v435
  %v468 = vunpack.c.l.b16 %v436
  %v469 = vunpack.c.l.b16 %v437
  %v470 = vunpack.c.l.b16 %v438
  %v471 = vunpack.c.l.b16 %v439
  %v472 = vunpack.c.l.b16 %v440
  %v473 = vunpack.c.l.b16 %v441
  %v474 = vunpack.c.l.b16 %v442
  %v475 = vunpack.c.l.b16 %v443
  %v476 = vunpack.c.l.b16 %v444
  %v477 = vunpack.c.l.b16 %v445
  %v478 = vunpack.c.l.b16 %v446
  %v479 = vunpack.c.l.b16 %v447
  %v480 = vpack.c.b16 %v465, %v464
  %v481 = vpack.c.b16 %v467, %v466
  %v482 = vpack.c.b16 %v469, %v468
  %v483 = vpack.c.b16 %v471, %v470
  %v484 = vpack.c.b16 %v473, %v472
  %v485 = vpack.c.b16 %v475, %v474
  %v486 = vpack.c.b16 %v477, %v476
  %v487 = vpack.c.b16 %v479, %v478
  %496 = vmatprep.subr.bf16.mxu0 0
  %497 = vmatpush1.bf16.msra.mxu0 %v480
  %498 = vmatprep.subr.bf16.mxu0 0
  %499 = vmatpush1.bf16.msra.mxu0 %v481
  %500 = vmatprep.subr.bf16.mxu0 0
  %501 = vmatpush1.bf16.msra.mxu0 %v482
  %502 = vmatprep.subr.bf16.mxu0 0
  %503 = vmatpush1.bf16.msra.mxu0 %v483
  %504 = vmatprep.subr.bf16.mxu0 0
  %505 = vmatpush1.bf16.msra.mxu0 %v484
  %506 = vmatprep.subr.bf16.mxu0 0
  %507 = vmatpush1.bf16.msra.mxu0 %v485
  %508 = vmatprep.subr.bf16.mxu0 0
  %509 = vmatpush1.bf16.msra.mxu0 %v486
  %510 = vmatprep.subr.bf16.mxu0 0
  %511 = vmatpush1.bf16.msra.mxu0 %v487
  %512 = vmatprep.subr.bf16.mxu0 0
  %513 = vmatpush1.bf16.msra.mxu0 0
  %514 = vmatprep.subr.bf16.mxu0 0
  %515 = vmatpush1.bf16.msra.mxu0 0
  %516 = vmatprep.subr.bf16.mxu0 0
  %517 = vmatpush1.bf16.msra.mxu0 0
  %518 = vmatprep.subr.bf16.mxu0 0
  %519 = vmatpush1.bf16.msra.mxu0 0
  %520 = vmatprep.subr.bf16.mxu0 0
  %521 = vmatpush1.bf16.msra.mxu0 0
  %522 = vmatprep.subr.bf16.mxu0 0
  %523 = vmatpush1.bf16.msra.mxu0 0
  %524 = vmatprep.subr.bf16.mxu0 0
  %525 = vmatpush1.bf16.msra.mxu0 0
  %526 = vmatprep.subr.bf16.mxu0 0
  %527 = vmatpush1.bf16.msra.mxu0 0
  %528 = vmatprep.mubr.bf16.mxu0 0
  %529 = vmatmul.mubr.bf16.gmra.mrb[0].mxu0 0
  %v530 = vpop.f32.mrb[0].mxu0
  %v531 = vadd.f32 0.0, %v530
  %v532 = vpop.f32.mrb[0].mxu0
  %v533 = vpop.f32.mrb[0].mxu0
  %v534 = vpop.f32.mrb[0].mxu0
  %535 = vdwg.mxu0
  %v536 = vadd.f32 %v402, %v531
  %v537 = vmax.f32 %v536, 0.0
  %v538 = vtanh.pop %v536
  %v539 = vsel %vm290, %v537, %v538
  %v540 = vpack.c.bf16 %v539, %v539
  %541 = vmatprep.subr.bf16.mxu0 0
  %542 = vmatpush1.bf16.msra.mxu0 %v480
  %543 = vmatprep.subr.bf16.mxu0 0
  %544 = vmatpush1.bf16.msra.mxu0 %v481
  %545 = vmatprep.subr.bf16.mxu0 0
  %546 = vmatpush1.bf16.msra.mxu0 %v482
  %547 = vmatprep.subr.bf16.mxu0 0
  %548 = vmatpush1.bf16.msra.mxu0 %v483
  %549 = vmatprep.subr.bf16.mxu0 0
  %550 = vmatpush1.bf16.msra.mxu0 %v484
  %551 = vmatprep.subr.bf16.mxu0 0
  %552 = vmatpush1.bf16.msra.mxu0 %v485
  %553 = vmatprep.subr.bf16.mxu0 0
  %554 = vmatpush1.bf16.msra.mxu0 %v486
  %555 = vmatprep.subr.bf16.mxu0 0
  %556 = vmatpush1.bf16.msra.mxu0 %v487
  %557 = vmatprep.subr.bf16.mxu0 0
  %558 = vmatpush1.bf16.msra.mxu0 0
  %559 = vmatprep.subr.bf16.mxu0 0
  %560 = vmatpush1.bf16.msra.mxu0 0
  %561 = vmatprep.subr.bf16.mxu0 0
  %562 = vmatpush1.bf16.msra.mxu0 0
  %563 = vmatprep.subr.bf16.mxu0 0
  %564 = vmatpush1.bf16.msra.mxu0 0
  %565 = vmatprep.subr.bf16.mxu0 0
  %566 = vmatpush1.bf16.msra.mxu0 0
  %567 = vmatprep.subr.bf16.mxu0 0
  %568 = vmatpush1.bf16.msra.mxu0 0
  %569 = vmatprep.subr.bf16.mxu0 0
  %570 = vmatpush1.bf16.msra.mxu0 0
  %571 = vmatprep.subr.bf16.mxu0 0
  %572 = vmatpush1.bf16.msra.mxu0 0
  %573 = vmatprep.mubr.bf16.mxu0 0
  %574 = vmatmul.mubr.bf16.gmra.mrb[0].mxu0 %v540
  %v575 = vpop.f32.mrb[0].mxu0
  %v576 = vadd.f32 0.0, %v575
  %v577 = vpop.f32.mrb[0].mxu0
  %v578 = vpop.f32.mrb[0].mxu0
  %v579 = vpop.f32.mrb[0].mxu0
  %580 = vdwg.mxu0
  %v581 = vadd.f32 %v405, %v576
  %v582 = vmax.f32 %v581, 0.0
  %v583 = vtanh.pop %v581
  %v584 = vsel %vm290, %v582, %v583
  %v585 = vpack.c.bf16 %v584, %v584
  %586 = vmatprep.subr.bf16.mxu0 0
  %587 = vmatpush1.bf16.msra.mxu0 %v480
  %588 = vmatprep.subr.bf16.mxu0 0
  %589 = vmatpush1.bf16.msra.mxu0 %v481
  %590 = vmatprep.subr.bf16.mxu0 0
  %591 = vmatpush1.bf16.msra.mxu0 %v482
  %592 = vmatprep.subr.bf16.mxu0 0
  %593 = vmatpush1.bf16.msra.mxu0 %v483
  %594 = vmatprep.subr.bf16.mxu0 0
  %595 = vmatpush1.bf16.msra.mxu0 %v484
  %596 = vmatprep.subr.bf16.mxu0 0
  %597 = vmatpush1.bf16.msra.mxu0 %v485
  %598 = vmatprep.subr.bf16.mxu0 0
  %599 = vmatpush1.bf16.msra.mxu0 %v486
  %600 = vmatprep.subr.bf16.mxu0 0
  %601 = vmatpush1.bf16.msra.mxu0 %v487
  %602 = vmatprep.subr.bf16.mxu0 0
  %603 = vmatpush1.bf16.msra.mxu0 0
  %604 = vmatprep.subr.bf16.mxu0 0
  %605 = vmatpush1.bf16.msra.mxu0 0
  %606 = vmatprep.subr.bf16.mxu0 0
  %607 = vmatpush1.bf16.msra.mxu0 0
  %608 = vmatprep.subr.bf16.mxu0 0
  %609 = vmatpush1.bf16.msra.mxu0 0
  %610 = vmatprep.subr.bf16.mxu0 0
  %611 = vmatpush1.bf16.msra.mxu0 0
  %612 = vmatprep.subr.bf16.mxu0 0
  %613 = vmatpush1.bf16.msra.mxu0 0
  %614 = vmatprep.subr.bf16.mxu0 0
  %615 = vmatpush1.bf16.msra.mxu0 0
  %616 = vmatprep.subr.bf16.mxu0 0
  %617 = vmatpush1.bf16.msra.mxu0 0
  %618 = vmatprep.mubr.bf16.mxu0 0
  %619 = vmatmul.mubr.bf16.gmra.mrb[0].mxu0 %v585
  %v620 = vpop.f32.mrb[0].mxu0
  %v621 = vadd.f32 0.0, %v620
  %v622 = vpop.f32.mrb[0].mxu0
  %v623 = vpop.f32.mrb[0].mxu0
  %v624 = vpop.f32.mrb[0].mxu0
  %625 = vdwg.mxu0
  %v626 = vadd.f32 %v410, %v621
  %v627 = vmax.f32 %v626, 0.0
  %v628 = vtanh.pop %v626
  %v629 = vsel %vm290, %v627, %v628
  %v630 = vpack.c.bf16 %v629, %v629
  %631 = vmatprep.subr.bf16.mxu0 0
  %632 = vmatpush1.bf16.msra.mxu0 %v480
  %633 = vmatprep.subr.bf16.mxu0 0
  %634 = vmatpush1.bf16.msra.mxu0 %v481
  %635 = vmatprep.subr.bf16.mxu0 0
  %636 = vmatpush1.bf16.msra.mxu0 %v482
  %637 = vmatprep.subr.bf16.mxu0 0
  %638 = vmatpush1.bf16.msra.mxu0 %v483
  %639 = vmatprep.subr.bf16.mxu0 0
  %640 = vmatpush1.bf16.msra.mxu0 %v484
  %641 = vmatprep.subr.bf16.mxu0 0
  %642 = vmatpush1.bf16.msra.mxu0 %v485
  %643 = vmatprep.subr.bf16.mxu0 0
  %644 = vmatpush1.bf16.msra.mxu0 %v486
  %645 = vmatprep.subr.bf16.mxu0 0
  %646 = vmatpush1.bf16.msra.mxu0 %v487
  %647 = vmatprep.subr.bf16.mxu0 0
  %648 = vmatpush1.bf16.msra.mxu0 0
  %649 = vmatprep.subr.bf16.mxu0 0
  %650 = vmatpush1.bf16.msra.mxu0 0
  %651 = vmatprep.subr.bf16.mxu0 0
  %652 = vmatpush1.bf16.msra.mxu0 0
  %653 = vmatprep.subr.bf16.mxu0 0
  %654 = vmatpush1.bf16.msra.mxu0 0
  %655 = vmatprep.subr.bf16.mxu0 0
  %656 = vmatpush1.bf16.msra.mxu0 0
  %657 = vmatprep.subr.bf16.mxu0 0
  %658 = vmatpush1.bf16.msra.mxu0 0
  %659 = vmatprep.subr.bf16.mxu0 0
  %660 = vmatpush1.bf16.msra.mxu0 0
  %661 = vmatprep.subr.bf16.mxu0 0
  %662 = vmatpush1.bf16.msra.mxu0 0
  %663 = vmatprep.mubr.bf16.mxu0 0
  %664 = vmatmul.mubr.bf16.gmra.mrb[0].mxu0 %v630
  %v665 = vpop.f32.mrb[0].mxu0
  %v666 = vadd.f32 0.0, %v665
  %v667 = vpop.f32.mrb[0].mxu0
  %v668 = vpop.f32.mrb[0].mxu0
  %v669 = vpop.f32.mrb[0].mxu0
  %670 = vdwg.mxu0
  %v671 = vadd.f32 %v413, %v666
  %v672 = vmax.f32 %v671, 0.0
  %v673 = vtanh.pop %v671
  %v674 = vsel %vm290, %v672, %v673
  %v675 = vpack.c.bf16 %v674, %v674
  %676 = vmatprep.subr.bf16.mxu0 0
  %677 = vmatpush1.bf16.msra.mxu0 %v480
  %678 = vmatprep.subr.bf16.mxu0 0
  %679 = vmatpush1.bf16.msra.mxu0 %v481
  %680 = vmatprep.subr.bf16.mxu0 0
  %681 = vmatpush1.bf16.msra.mxu0 %v482
  %682 = vmatprep.subr.bf16.mxu0 0
  %683 = vmatpush1.bf16.msra.mxu0 %v483
  %684 = vmatprep.subr.bf16.mxu0 0
  %685 = vmatpush1.bf16.msra.mxu0 %v484
  %686 = vmatprep.subr.bf16.mxu0 0
  %687 = vmatpush1.bf16.msra.mxu0 %v485
  %688 = vmatprep.subr.bf16.mxu0 0
  %689 = vmatpush1.bf16.msra.mxu0 %v486
  %690 = vmatprep.subr.bf16.mxu0 0
  %691 = vmatpush1.bf16.msra.mxu0 %v487
  %692 = vmatprep.subr.bf16.mxu0 0
  %693 = vmatpush1.bf16.msra.mxu0 0
  %694 = vmatprep.subr.bf16.mxu0 0
  %695 = vmatpush1.bf16.msra.mxu0 0
  %696 = vmatprep.subr.bf16.mxu0 0
  %697 = vmatpush1.bf16.msra.mxu0 0
  %698 = vmatprep.subr.bf16.mxu0 0
  %699 = vmatpush1.bf16.msra.mxu0 0
  %700 = vmatprep.subr.bf16.mxu0 0
  %701 = vmatpush1.bf16.msra.mxu0 0
  %702 = vmatprep.subr.bf16.mxu0 0
  %703 = vmatpush1.bf16.msra.mxu0 0
  %704 = vmatprep.subr.bf16.mxu0 0
  %705 = vmatpush1.bf16.msra.mxu0 0
  %706 = vmatprep.subr.bf16.mxu0 0
  %707 = vmatpush1.bf16.msra.mxu0 0
  %708 = vmatprep.mubr.bf16.mxu0 0
  %709 = vmatmul.mubr.bf16.gmra.mrb[0].mxu0 %v675
  %v710 = vpop.f32.mrb[0].mxu0
  %v711 = vadd.f32 0.0, %v710
  %v712 = vpop.f32.mrb[0].mxu0
  %v713 = vpop.f32.mrb[0].mxu0
  %v714 = vpop.f32.mrb[0].mxu0
  %715 = vdwg.mxu0
  %v716 = vadd.f32 %v418, %v711
  %v717 = vmax.f32 %v716, 0.0
  %v718 = vtanh.pop %v716
  %v719 = vsel %vm290, %v717, %v718
  %v720 = vpack.c.bf16 %v719, %v719
  %721 = vmatprep.subr.bf16.mxu0 0
  %722 = vmatpush1.bf16.msra.mxu0 %v480
  %723 = vmatprep.subr.bf16.mxu0 0
  %724 = vmatpush1.bf16.msra.mxu0 %v481
  %725 = vmatprep.subr.bf16.mxu0 0
  %726 = vmatpush1.bf16.msra.mxu0 %v482
  %727 = vmatprep.subr.bf16.mxu0 0
  %728 = vmatpush1.bf16.msra.mxu0 %v483
  %729 = vmatprep.subr.bf16.mxu0 0
  %730 = vmatpush1.bf16.msra.mxu0 %v484
  %731 = vmatprep.subr.bf16.mxu0 0
  %732 = vmatpush1.bf16.msra.mxu0 %v485
  %733 = vmatprep.subr.bf16.mxu0 0
  %734 = vmatpush1.bf16.msra.mxu0 %v486
  %735 = vmatprep.subr.bf16.mxu0 0
  %736 = vmatpush1.bf16.msra.mxu0 %v487
  %737 = vmatprep.subr.bf16.mxu0 0
  %738 = vmatpush1.bf16.msra.mxu0 0
  %739 = vmatprep.subr.bf16.mxu0 0
  %740 = vmatpush1.bf16.msra.mxu0 0
  %741 = vmatprep.subr.bf16.mxu0 0
  %742 = vmatpush1.bf16.msra.mxu0 0
  %743 = vmatprep.subr.bf16.mxu0 0
  %744 = vmatpush1.bf16.msra.mxu0 0
  %745 = vmatprep.subr.bf16.mxu0 0
  %746 = vmatpush1.bf16.msra.mxu0 0
  %747 = vmatprep.subr.bf16.mxu0 0
  %748 = vmatpush1.bf16.msra.mxu0 0
  %749 = vmatprep.subr.bf16.mxu0 0
  %750 = vmatpush1.bf16.msra.mxu0 0
  %751 = vmatprep.subr.bf16.mxu0 0
  %752 = vmatpush1.bf16.msra.mxu0 0
  %753 = vmatprep.mubr.bf16.mxu0 0
  %754 = vmatmul.mubr.bf16.gmra.mrb[0].mxu0 %v720
  %v755 = vpop.f32.mrb[0].mxu0
  %v756 = vadd.f32 0.0, %v755
  %v757 = vpop.f32.mrb[0].mxu0
  %v758 = vpop.f32.mrb[0].mxu0
  %v759 = vpop.f32.mrb[0].mxu0
  %760 = vdwg.mxu0
  %v761 = vadd.f32 %v421, %v756
  %v762 = vmax.f32 %v761, 0.0
  %v763 = vtanh.pop %v761
  %v764 = vsel %vm290, %v762, %v763
  %v765 = vpack.c.bf16 %v764, %v764
  %766 = vmatprep.subr.bf16.mxu0 0
  %767 = vmatpush1.bf16.msra.mxu0 %v480
  %768 = vmatprep.subr.bf16.mxu0 0
  %769 = vmatpush1.bf16.msra.mxu0 %v481
  %770 = vmatprep.subr.bf16.mxu0 0
  %771 = vmatpush1.bf16.msra.mxu0 %v482
  %772 = vmatprep.subr.bf16.mxu0 0
  %773 = vmatpush1.bf16.msra.mxu0 %v483
  %774 = vmatprep.subr.bf16.mxu0 0
  %775 = vmatpush1.bf16.msra.mxu0 %v484
  %776 = vmatprep.subr.bf16.mxu0 0
  %777 = vmatpush1.bf16.msra.mxu0 %v485
  %778 = vmatprep.subr.bf16.mxu0 0
  %779 = vmatpush1.bf16.msra.mxu0 %v486
  %780 = vmatprep.subr.bf16.mxu0 0
  %781 = vmatpush1.bf16.msra.mxu0 %v487
  %782 = vmatprep.subr.bf16.mxu0 0
  %783 = vmatpush1.bf16.msra.mxu0 0
  %784 = vmatprep.subr.bf16.mxu0 0
  %785 = vmatpush1.bf16.msra.mxu0 0
  %786 = vmatprep.subr.bf16.mxu0 0
  %787 = vmatpush1.bf16.msra.mxu0 0
  %788 = vmatprep.subr.bf16.mxu0 0
  %789 = vmatpush1.bf16.msra.mxu0 0
  %790 = vmatprep.subr.bf16.mxu0 0
  %791 = vmatpush1.bf16.msra.mxu0 0
  %792 = vmatprep.subr.bf16.mxu0 0
  %793 = vmatpush1.bf16.msra.mxu0 0
  %794 = vmatprep.subr.bf16.mxu0 0
  %795 = vmatpush1.bf16.msra.mxu0 0
  %796 = vmatprep.subr.bf16.mxu0 0
  %797 = vmatpush1.bf16.msra.mxu0 0
  %798 = vmatprep.mubr.bf16.mxu0 0
  %799 = vmatmul.mubr.bf16.gmra.mrb[0].mxu0 %v765
  %v800 = vpop.f32.mrb[0].mxu0
  %v801 = vadd.f32 0.0, %v800
  %v802 = vpop.f32.mrb[0].mxu0
  %v803 = vpop.f32.mrb[0].mxu0
  %v804 = vpop.f32.mrb[0].mxu0
  %805 = vdwg.mxu0
  %v806 = vadd.f32 %v426, %v801
  %v807 = vmax.f32 %v806, 0.0
  %v808 = vtanh.pop %v806
  %v809 = vsel %vm290, %v807, %v808
  %v810 = vpack.c.bf16 %v809, %v809
  %811 = vmatprep.subr.bf16.mxu0 0
  %812 = vmatpush1.bf16.msra.mxu0 %v480
  %813 = vmatprep.subr.bf16.mxu0 0
  %814 = vmatpush1.bf16.msra.mxu0 %v481
  %815 = vmatprep.subr.bf16.mxu0 0
  %816 = vmatpush1.bf16.msra.mxu0 %v482
  %817 = vmatprep.subr.bf16.mxu0 0
  %818 = vmatpush1.bf16.msra.mxu0 %v483
  %819 = vmatprep.subr.bf16.mxu0 0
  %820 = vmatpush1.bf16.msra.mxu0 %v484
  %821 = vmatprep.subr.bf16.mxu0 0
  %822 = vmatpush1.bf16.msra.mxu0 %v485
  %823 = vmatprep.subr.bf16.mxu0 0
  %824 = vmatpush1.bf16.msra.mxu0 %v486
  %825 = vmatprep.subr.bf16.mxu0 0
  %826 = vmatpush1.bf16.msra.mxu0 %v487
  %827 = vmatprep.subr.bf16.mxu0 0
  %828 = vmatpush1.bf16.msra.mxu0 0
  %829 = vmatprep.subr.bf16.mxu0 0
  %830 = vmatpush1.bf16.msra.mxu0 0
  %831 = vmatprep.subr.bf16.mxu0 0
  %832 = vmatpush1.bf16.msra.mxu0 0
  %833 = vmatprep.subr.bf16.mxu0 0
  %834 = vmatpush1.bf16.msra.mxu0 0
  %835 = vmatprep.subr.bf16.mxu0 0
  %836 = vmatpush1.bf16.msra.mxu0 0
  %837 = vmatprep.subr.bf16.mxu0 0
  %838 = vmatpush1.bf16.msra.mxu0 0
  %839 = vmatprep.subr.bf16.mxu0 0
  %840 = vmatpush1.bf16.msra.mxu0 0
  %841 = vmatprep.subr.bf16.mxu0 0
  %842 = vmatpush1.bf16.msra.mxu0 0
  %843 = vmatprep.mubr.bf16.mxu0 0
  %844 = vmatmul.mubr.bf16.gmra.mrb[0].mxu0 %v810
  %v845 = vpop.f32.mrb[0].mxu0
  %v846 = vadd.f32 0.0, %v845
  %v847 = vpop.f32.mrb[0].mxu0
  %v848 = vpop.f32.mrb[0].mxu0
  %v849 = vpop.f32.mrb[0].mxu0
  %850 = vdwg.mxu0
  %v851 = vadd.f32 %v429, %v846
  %v852 = vmax.f32 %v851, 0.0
  %v853 = vtanh.pop %v851
  %v854 = vsel %vm290, %v852, %v853
  %v855 = vpack.c.bf16 %v584, %v539
  %v856 = vpack.c.bf16 %v674, %v629
  %v857 = vpack.c.bf16 %v764, %v719
  %v858 = vpack.c.bf16 %v854, %v809
  %v859 = vld [vmem:[%s4] sm:$0xff]
  %v860 = vld [vmem:[%s4 + $0x8] sm:$0xff]
  %v861 = vld [vmem:[%s4 + $0x10] sm:$0xff]
  %v862 = vld [vmem:[%s4 + $0x18] sm:$0xff]
  %v863 = vld [vmem:[%s4 + $0x20] sm:$0xff]
  %v864 = vld [vmem:[%s4 + $0x28] sm:$0xff]
  %v865 = vld [vmem:[%s4 + $0x30] sm:$0xff]
  %v866 = vld [vmem:[%s4 + $0x38] sm:$0xff]
  %v867 = vld [vmem:[%s4 + $0x40] sm:$0xff]
  %v868 = vld [vmem:[%s4 + $0x48] sm:$0xff]
  %v869 = vld [vmem:[%s4 + $0x50] sm:$0xff]
  %v870 = vld [vmem:[%s4 + $0x58] sm:$0xff]
  %v871 = vld [vmem:[%s4 + $0x60] sm:$0xff]
  %v872 = vld [vmem:[%s4 + $0x68] sm:$0xff]
  %v873 = vld [vmem:[%s4 + $0x70] sm:$0xff]
  %v874 = vld [vmem:[%s4 + $0x78] sm:$0xff]
  %v891 = vunpack.c.l.b16 %v859
  %v892 = vunpack.c.h.b16 %v859
  %v893 = vunpack.c.l.b16 %v860
  %v894 = vunpack.c.h.b16 %v860
  %v895 = vunpack.c.l.b16 %v861
  %v896 = vunpack.c.h.b16 %v861
  %v897 = vunpack.c.l.b16 %v862
  %v898 = vunpack.c.h.b16 %v862
  %v899 = vunpack.c.l.b16 %v863
  %v900 = vunpack.c.h.b16 %v863
  %v901 = vunpack.c.l.b16 %v864
  %v902 = vunpack.c.h.b16 %v864
  %v903 = vunpack.c.l.b16 %v865
  %v904 = vunpack.c.h.b16 %v865
  %v905 = vunpack.c.l.b16 %v866
  %v906 = vunpack.c.h.b16 %v866
  %v907 = vunpack.c.l.b16 %v867
  %v908 = vunpack.c.h.b16 %v867
  %v909 = vunpack.c.l.b16 %v868
  %v910 = vunpack.c.h.b16 %v868
  %v911 = vunpack.c.l.b16 %v869
  %v912 = vunpack.c.h.b16 %v869
  %v913 = vunpack.c.l.b16 %v870
  %v914 = vunpack.c.h.b16 %v870
  %v915 = vunpack.c.l.b16 %v871
  %v916 = vunpack.c.h.b16 %v871
  %v917 = vunpack.c.l.b16 %v872
  %v918 = vunpack.c.h.b16 %v872
  %v919 = vunpack.c.l.b16 %v873
  %v920 = vunpack.c.h.b16 %v873
  %v921 = vunpack.c.l.b16 %v874
  %v922 = vunpack.c.h.b16 %v874
  %v923 = vpack.c.b16 %v893, %v891
  %v924 = vpack.c.b16 %v894, %v892
  %v925 = vpack.c.b16 %v897, %v895
  %v926 = vpack.c.b16 %v898, %v896
  %v927 = vpack.c.b16 %v901, %v899
  %v928 = vpack.c.b16 %v902, %v900
  %v929 = vpack.c.b16 %v905, %v903
  %v930 = vpack.c.b16 %v906, %v904
  %v931 = vpack.c.b16 %v909, %v907
  %v932 = vpack.c.b16 %v910, %v908
  %v933 = vpack.c.b16 %v913, %v911
  %v934 = vpack.c.b16 %v914, %v912
  %v935 = vpack.c.b16 %v917, %v915
  %v936 = vpack.c.b16 %v918, %v916
  %v937 = vpack.c.b16 %v921, %v919
  %v938 = vpack.c.b16 %v922, %v920
  %955 = vmatprep.subr.bf16.mxu0 %v924
  %956 = vmatpush1.bf16.msra.mxu0 %v923
  %957 = vmatprep.subr.bf16.mxu0 %v926
  %958 = vmatpush1.bf16.msra.mxu0 %v925
  %959 = vmatprep.subr.bf16.mxu0 %v928
  %960 = vmatpush1.bf16.msra.mxu0 %v927
  %961 = vmatprep.subr.bf16.mxu0 %v930
  %962 = vmatpush1.bf16.msra.mxu0 %v929
  %963 = vmatprep.subr.bf16.mxu0 %v932
  %964 = vmatpush1.bf16.msra.mxu0 %v931
  %965 = vmatprep.subr.bf16.mxu0 %v934
  %966 = vmatpush1.bf16.msra.mxu0 %v933
  %967 = vmatprep.subr.bf16.mxu0 %v936
  %968 = vmatpush1.bf16.msra.mxu0 %v935
  %969 = vmatprep.subr.bf16.mxu0 %v938
  %970 = vmatpush1.bf16.msra.mxu0 %v937
  %971 = vmatprep.subr.bf16.mxu0 0
  %972 = vmatpush1.bf16.msra.mxu0 0
  %973 = vmatprep.subr.bf16.mxu0 0
  %974 = vmatpush1.bf16.msra.mxu0 0
  %975 = vmatprep.subr.bf16.mxu0 0
  %976 = vmatpush1.bf16.msra.mxu0 0
  %977 = vmatprep.subr.bf16.mxu0 0
  %978 = vmatpush1.bf16.msra.mxu0 0
  %979 = vmatprep.subr.bf16.mxu0 0
  %980 = vmatpush1.bf16.msra.mxu0 0
  %981 = vmatprep.subr.bf16.mxu0 0
  %982 = vmatpush1.bf16.msra.mxu0 0
  %983 = vmatprep.subr.bf16.mxu0 0
  %984 = vmatpush1.bf16.msra.mxu0 0
  %985 = vmatprep.subr.bf16.mxu0 0
  %986 = vmatpush1.bf16.msra.mxu0 0
  %987 = vmatprep.mubr.bf16.mxu0 0
  %988 = vmatmul.mubr.bf16.gmra.mrb[0].mxu0 %v855
  %v989 = vpop.f32.mrb[0].mxu0
  %v990 = vadd.f32 0.0, %v989
  %v991 = vpop.f32.mrb[0].mxu0
  %v992 = vadd.f32 0.0, %v991
  %v993 = vpop.f32.mrb[0].mxu0
  %v994 = vadd.f32 0.0, %v993
  %v995 = vpop.f32.mrb[0].mxu0
  %v996 = vadd.f32 0.0, %v995
  %997 = vmatprep.mubr.bf16.mxu0 0
  %998 = vmatmul.mubr.bf16.gmra.mrb[0].mxu0 %v856
  %v999 = vpop.f32.mrb[0].mxu0
  %v1000 = vadd.f32 0.0, %v999
  %v1001 = vpop.f32.mrb[0].mxu0
  %v1002 = vadd.f32 0.0, %v1001
  %v1003 = vpop.f32.mrb[0].mxu0
  %v1004 = vadd.f32 0.0, %v1003
  %v1005 = vpop.f32.mrb[0].mxu0
  %v1006 = vadd.f32 0.0, %v1005
  %1007 = vmatprep.mubr.bf16.mxu0 0
  %1008 = vmatmul.mubr.bf16.gmra.mrb[0].mxu0 %v857
  %v1009 = vpop.f32.mrb[0].mxu0
  %v1010 = vadd.f32 0.0, %v1009
  %v1011 = vpop.f32.mrb[0].mxu0
  %v1012 = vadd.f32 0.0, %v1011
  %v1013 = vpop.f32.mrb[0].mxu0
  %v1014 = vadd.f32 0.0, %v1013
  %v1015 = vpop.f32.mrb[0].mxu0
  %v1016 = vadd.f32 0.0, %v1015
  %1017 = vmatprep.mubr.bf16.mxu0 0
  %1018 = vmatmul.mubr.bf16.gmra.mrb[0].mxu0 %v858
  %v1019 = vpop.f32.mrb[0].mxu0
  %v1020 = vadd.f32 0.0, %v1019
  %v1021 = vpop.f32.mrb[0].mxu0
  %v1022 = vadd.f32 0.0, %v1021
  %v1023 = vpop.f32.mrb[0].mxu0
  %v1024 = vadd.f32 0.0, %v1023
  %v1025 = vpop.f32.mrb[0].mxu0
  %v1026 = vadd.f32 0.0, %v1025
  %1027 = vdwg.mxu0
  %v1028 = vmax.f32 %v990, 0.0
  %v1029 = vmax.f32 %v994, 0.0
  %v1030 = vmax.f32 %v1000, 0.0
  %v1031 = vmax.f32 %v1004, 0.0
  %v1032 = vmax.f32 %v1010, 0.0
  %v1033 = vmax.f32 %v1014, 0.0
  %v1034 = vmax.f32 %v1020, 0.0
  %v1035 = vmax.f32 %v1024, 0.0
  %vm1036 = vcmp.gt.f32.partialorder %v992, 20.0
  %vm1037 = vcmp.gt.f32.partialorder %v996, 20.0
  %vm1038 = vcmp.gt.f32.partialorder %v1002, 20.0
  %vm1039 = vcmp.gt.f32.partialorder %v1006, 20.0
  %vm1040 = vcmp.gt.f32.partialorder %v1012, 20.0
  %vm1041 = vcmp.gt.f32.partialorder %v1016, 20.0
  %vm1042 = vcmp.gt.f32.partialorder %v1022, 20.0
  %vm1043 = vcmp.gt.f32.partialorder %v1026, 20.0
  %v1044 = vmin.f32 %v992, 20.0
  %v1045 = vmin.f32 %v996, 20.0
  %v1046 = vmin.f32 %v1002, 20.0
  %v1047 = vmin.f32 %v1006, 20.0
  %v1048 = vmin.f32 %v1012, 20.0
  %v1049 = vmin.f32 %v1016, 20.0
  %v1050 = vmin.f32 %v1022, 20.0
  %v1051 = vmin.f32 %v1026, 20.0
  %v1052 = vmul.f32 %v1044, 1.442695
  %v1053 = vpow.pop %v1052
  %v1054 = vmul.f32 %v1045, 1.442695
  %v1055 = vpow.pop %v1054
  %v1056 = vmul.f32 %v1046, 1.442695
  %v1057 = vpow.pop %v1056
  %v1058 = vmul.f32 %v1047, 1.442695
  %v1059 = vpow.pop %v1058
  %v1060 = vmul.f32 %v1048, 1.442695
  %v1061 = vpow.pop %v1060
  %v1062 = vmul.f32 %v1049, 1.442695
  %v1063 = vpow.pop %v1062
  %v1064 = vmul.f32 %v1050, 1.442695
  %v1065 = vpow.pop %v1064
  %v1066 = vmul.f32 %v1051, 1.442695
  %v1067 = vpow.pop %v1066
  %v1068 = vadd.f32 %v1053, 1.0
  %v1069 = vlog2.pop %v1068
  %v1070 = vmul.f32 %v1069, 0.6931472
  %v1071 = vmul.f32 -0.5, %v1053
  %v1072 = vadd.f32 %v1071, 1.0
  %v1073 = vmul.f32 %v1072, %v1053
  %v1074 = vand.u32 2147483647, %v1053
  %vm1075 = vcmp.lt.f32.partialorder %v1074, 0.0004427343
  %v1076 = vsel %vm1075, %v1073, %v1070
  %v1077 = vadd.f32 %v1055, 1.0
  %v1078 = vlog2.pop %v1077
  %v1079 = vmul.f32 %v1078, 0.6931472
  %v1080 = vmul.f32 -0.5, %v1055
  %v1081 = vadd.f32 %v1080, 1.0
  %v1082 = vmul.f32 %v1081, %v1055
  %v1083 = vand.u32 2147483647, %v1055
  %vm1084 = vcmp.lt.f32.partialorder %v1083, 0.0004427343
  %v1085 = vsel %vm1084, %v1082, %v1079
  %v1086 = vadd.f32 %v1057, 1.0
  %v1087 = vlog2.pop %v1086
  %v1088 = vmul.f32 %v1087, 0.6931472
  %v1089 = vmul.f32 -0.5, %v1057
  %v1090 = vadd.f32 %v1089, 1.0
  %v1091 = vmul.f32 %v1090, %v1057
  %v1092 = vand.u32 2147483647, %v1057
  %vm1093 = vcmp.lt.f32.partialorder %v1092, 0.0004427343
  %v1094 = vsel %vm1093, %v1091, %v1088
  %v1095 = vadd.f32 %v1059, 1.0
  %v1096 = vlog2.pop %v1095
  %v1097 = vmul.f32 %v1096, 0.6931472
  %v1098 = vmul.f32 -0.5, %v1059
  %v1099 = vadd.f32 %v1098, 1.0
  %v1100 = vmul.f32 %v1099, %v1059
  %v1101 = vand.u32 2147483647, %v1059
  %vm1102 = vcmp.lt.f32.partialorder %v1101, 0.0004427343
  %v1103 = vsel %vm1102, %v1100, %v1097
  %v1104 = vadd.f32 %v1061, 1.0
  %v1105 = vlog2.pop %v1104
  %v1106 = vmul.f32 %v1105, 0.6931472
  %v1107 = vmul.f32 -0.5, %v1061
  %v1108 = vadd.f32 %v1107, 1.0
  %v1109 = vmul.f32 %v1108, %v1061
  %v1110 = vand.u32 2147483647, %v1061
  %vm1111 = vcmp.lt.f32.partialorder %v1110, 0.0004427343
  %v1112 = vsel %vm1111, %v1109, %v1106
  %v1113 = vadd.f32 %v1063, 1.0
  %v1114 = vlog2.pop %v1113
  %v1115 = vmul.f32 %v1114, 0.6931472
  %v1116 = vmul.f32 -0.5, %v1063
  %v1117 = vadd.f32 %v1116, 1.0
  %v1118 = vmul.f32 %v1117, %v1063
  %v1119 = vand.u32 2147483647, %v1063
  %vm1120 = vcmp.lt.f32.partialorder %v1119, 0.0004427343
  %v1121 = vsel %vm1120, %v1118, %v1115
  %v1122 = vadd.f32 %v1065, 1.0
  %v1123 = vlog2.pop %v1122
  %v1124 = vmul.f32 %v1123, 0.6931472
  %v1125 = vmul.f32 -0.5, %v1065
  %v1126 = vadd.f32 %v1125, 1.0
  %v1127 = vmul.f32 %v1126, %v1065
  %v1128 = vand.u32 2147483647, %v1065
  %vm1129 = vcmp.lt.f32.partialorder %v1128, 0.0004427343
  %v1130 = vsel %vm1129, %v1127, %v1124
  %v1131 = vadd.f32 %v1067, 1.0
  %v1132 = vlog2.pop %v1131
  %v1133 = vmul.f32 %v1132, 0.6931472
  %v1134 = vmul.f32 -0.5, %v1067
  %v1135 = vadd.f32 %v1134, 1.0
  %v1136 = vmul.f32 %v1135, %v1067
  %v1137 = vand.u32 2147483647, %v1067
  %vm1138 = vcmp.lt.f32.partialorder %v1137, 0.0004427343
  %v1139 = vsel %vm1138, %v1136, %v1133
  %v1140 = vsel %vm1036, %v992, %v1076
  %v1141 = vsel %vm1037, %v996, %v1085
  %v1142 = vsel %vm1038, %v1002, %v1094
  %v1143 = vsel %vm1039, %v1006, %v1103
  %v1144 = vsel %vm1040, %v1012, %v1112
  %v1145 = vsel %vm1041, %v1016, %v1121
  %v1146 = vsel %vm1042, %v1022, %v1130
  %v1147 = vsel %vm1043, %v1026, %v1139
  %v1148 = vsub.f32 0.0, %v1140
  %v1149 = vsub.f32 0.0, %v1141
  %v1150 = vsub.f32 0.0, %v1142
  %v1151 = vsub.f32 0.0, %v1143
  %v1152 = vsub.f32 0.0, %v1144
  %v1153 = vsub.f32 0.0, %v1145
  %v1154 = vsub.f32 0.0, %v1146
  %v1155 = vsub.f32 0.0, %v1147
  %v1156 = vmul.f32 %v1148, %v25
  %v1157 = vmul.f32 %v1149, %v26
  %v1158 = vmul.f32 %v1150, %v27
  %v1159 = vmul.f32 %v1151, %v28
  %v1160 = vmul.f32 %v1152, %v29
  %v1161 = vmul.f32 %v1153, %v30
  %v1162 = vmul.f32 %v1154, %v31
  %v1163 = vmul.f32 %v1155, %v32
  %v1164 = vadd.f32 %v1028, %v1156
  %v1165 = vadd.f32 %v1029, %v1157
  %v1166 = vadd.f32 %v1030, %v1158
  %v1167 = vadd.f32 %v1031, %v1159
  %v1168 = vadd.f32 %v1032, %v1160
  %v1169 = vadd.f32 %v1033, %v1161
  %v1170 = vadd.f32 %v1034, %v1162
  %v1171 = vadd.f32 %v1035, %v1163
  %v1172 = vadd.f32 %v25, %v1164
  %v1173 = vadd.f32 %v26, %v1165
  %v1174 = vadd.f32 %v27, %v1166
  %v1175 = vadd.f32 %v28, %v1167
  %v1176 = vadd.f32 %v29, %v1168
  %v1177 = vadd.f32 %v30, %v1169
  %v1178 = vadd.f32 %v31, %v1170
  %v1179 = vadd.f32 %v32, %v1171
  %v1180 = vmax.f32 %v1172, 0.0
  %v1181 = vmax.f32 %v1173, 0.0
  %v1182 = vmax.f32 %v1174, 0.0
  %v1183 = vmax.f32 %v1175, 0.0
  %v1184 = vmax.f32 %v1176, 0.0
  %v1185 = vmax.f32 %v1177, 0.0
  %v1186 = vmax.f32 %v1178, 0.0
  %v1187 = vmax.f32 %v1179, 0.0
  %v1188 = vpack.c.bf16 %v1187, %v1187
  %1189 = vmatprep.subr.bf16.mxu0 0
  %1190 = vmatpush1.bf16.msra.mxu0 %v88
  %1191 = vmatprep.subr.bf16.mxu0 0
  %1192 = vmatpush1.bf16.msra.mxu0 %v89
  %1193 = vmatprep.subr.bf16.mxu0 0
  %1194 = vmatpush1.bf16.msra.mxu0 %v90
  %1195 = vmatprep.subr.bf16.mxu0 0
  %1196 = vmatpush1.bf16.msra.mxu0 %v91
  %1197 = vmatprep.subr.bf16.mxu0 0
  %1198 = vmatpush1.bf16.msra.mxu0 %v92
  %1199 = vmatprep.subr.bf16.mxu0 0
  %1200 = vmatpush1.bf16.msra.mxu0 %v93
  %1201 = vmatprep.subr.bf16.mxu0 0
  %1202 = vmatpush1.bf16.msra.mxu0 %v94
  %1203 = vmatprep.subr.bf16.mxu0 0
  %1204 = vmatpush1.bf16.msra.mxu0 %v95
  %1205 = vmatprep.subr.bf16.mxu0 0
  %1206 = vmatpush1.bf16.msra.mxu0 0
  %1207 = vmatprep.subr.bf16.mxu0 0
  %1208 = vmatpush1.bf16.msra.mxu0 0
  %1209 = vmatprep.subr.bf16.mxu0 0
  %1210 = vmatpush1.bf16.msra.mxu0 0
  %1211 = vmatprep.subr.bf16.mxu0 0
  %1212 = vmatpush1.bf16.msra.mxu0 0
  %1213 = vmatprep.subr.bf16.mxu0 0
  %1214 = vmatpush1.bf16.msra.mxu0 0
  %1215 = vmatprep.subr.bf16.mxu0 0
  %1216 = vmatpush1.bf16.msra.mxu0 0
  %1217 = vmatprep.subr.bf16.mxu0 0
  %1218 = vmatpush1.bf16.msra.mxu0 0
  %1219 = vmatprep.subr.bf16.mxu0 0
  %1220 = vmatpush1.bf16.msra.mxu0 0
  %1221 = vmatprep.mubr.bf16.mxu0 0
  %1222 = vmatmul.mubr.bf16.gmra.mrb[0].mxu0 %v1188
  %v1223 = vpop.f32.mrb[0].mxu0
  %v1224 = vadd.f32 0.0, %v1223
  %v1225 = vpop.f32.mrb[0].mxu0
  %v1226 = vpop.f32.mrb[0].mxu0
  %v1227 = vpop.f32.mrb[0].mxu0
  %1228 = vdwg.mxu0
  %v1229 = vmax.f32 %v1224, 0.0
  %vm1230 = vcmp.gt.f32.partialorder %v1224, 20.0
  %v1231 = vmin.f32 %v1224, 20.0
  %v1232 = vmul.f32 %v1231, 1.442695
  %v1233 = vpow.pop %v1232
  %v1234 = vadd.f32 %v1233, 1.0
  %v1235 = vlog2.pop %v1234
  %v1236 = vmul.f32 %v1235, 0.6931472
  %v1237 = vmul.f32 -0.5, %v1233
  %v1238 = vadd.f32 %v1237, 1.0
  %v1239 = vmul.f32 %v1238, %v1233
  %v1240 = vand.u32 2147483647, %v1233
  %vm1241 = vcmp.lt.f32.partialorder %v1240, 0.0004427343
  %v1242 = vsel %vm1241, %v1239, %v1236
  %v1243 = vsel %vm1230, %v1224, %v1242
  %v1244 = vsel %vm290, %v1229, %v1243
  %v1245 = vpack.c.bf16 %v1244, %v1244
  %v1246 = vpack.c.bf16 %v854, %v854
  %1247 = vmatprep.subr.bf16.mxu0 0
  %1248 = vmatpush1.bf16.msra.mxu0 %v480
  %1249 = vmatprep.subr.bf16.mxu0 0
  %1250 = vmatpush1.bf16.msra.mxu0 %v481
  %1251 = vmatprep.subr.bf16.mxu0 0
  %1252 = vmatpush1.bf16.msra.mxu0 %v482
  %1253 = vmatprep.subr.bf16.mxu0 0
  %1254 = vmatpush1.bf16.msra.mxu0 %v483
  %1255 = vmatprep.subr.bf16.mxu0 0
  %1256 = vmatpush1.bf16.msra.mxu0 %v484
  %1257 = vmatprep.subr.bf16.mxu0 0
  %1258 = vmatpush1.bf16.msra.mxu0 %v485
  %1259 = vmatprep.subr.bf16.mxu0 0
  %1260 = vmatpush1.bf16.msra.mxu0 %v486
  %1261 = vmatprep.subr.bf16.mxu0 0
  %1262 = vmatpush1.bf16.msra.mxu0 %v487
  %1263 = vmatprep.subr.bf16.mxu0 0
  %1264 = vmatpush1.bf16.msra.mxu0 0
  %1265 = vmatprep.subr.bf16.mxu0 0
  %1266 = vmatpush1.bf16.msra.mxu0 0
  %1267 = vmatprep.subr.bf16.mxu0 0
  %1268 = vmatpush1.bf16.msra.mxu0 0
  %1269 = vmatprep.subr.bf16.mxu0 0
  %1270 = vmatpush1.bf16.msra.mxu0 0
  %1271 = vmatprep.subr.bf16.mxu0 0
  %1272 = vmatpush1.bf16.msra.mxu0 0
  %1273 = vmatprep.subr.bf16.mxu0 0
  %1274 = vmatpush1.bf16.msra.mxu0 0
  %1275 = vmatprep.subr.bf16.mxu0 0
  %1276 = vmatpush1.bf16.msra.mxu0 0
  %1277 = vmatprep.subr.bf16.mxu0 0
  %1278 = vmatpush1.bf16.msra.mxu0 0
  %1279 = vmatprep.mubr.bf16.mxu0 0
  %1280 = vmatmul.mubr.bf16.gmra.mrb[0].mxu0 %v1246
  %v1281 = vpop.f32.mrb[0].mxu0
  %v1282 = vadd.f32 0.0, %v1281
  %v1283 = vpop.f32.mrb[0].mxu0
  %v1284 = vpop.f32.mrb[0].mxu0
  %v1285 = vpop.f32.mrb[0].mxu0
  %1286 = vdwg.mxu0
  %1287 = vmatprep.subr.bf16.mxu0 0
  %1288 = vmatpush1.bf16.msra.mxu0 %v351
  %1289 = vmatprep.subr.bf16.mxu0 0
  %1290 = vmatpush1.bf16.msra.mxu0 %v352
  %1291 = vmatprep.subr.bf16.mxu0 0
  %1292 = vmatpush1.bf16.msra.mxu0 %v353
  %1293 = vmatprep.subr.bf16.mxu0 0
  %1294 = vmatpush1.bf16.msra.mxu0 %v354
  %1295 = vmatprep.subr.bf16.mxu0 0
  %1296 = vmatpush1.bf16.msra.mxu0 %v355
  %1297 = vmatprep.subr.bf16.mxu0 0
  %1298 = vmatpush1.bf16.msra.mxu0 %v356
  %1299 = vmatprep.subr.bf16.mxu0 0
  %1300 = vmatpush1.bf16.msra.mxu0 %v357
  %1301 = vmatprep.subr.bf16.mxu0 0
  %1302 = vmatpush1.bf16.msra.mxu0 %v358
  %1303 = vmatprep.subr.bf16.mxu0 0
  %1304 = vmatpush1.bf16.msra.mxu0 0
  %1305 = vmatprep.subr.bf16.mxu0 0
  %1306 = vmatpush1.bf16.msra.mxu0 0
  %1307 = vmatprep.subr.bf16.mxu0 0
  %1308 = vmatpush1.bf16.msra.mxu0 0
  %1309 = vmatprep.subr.bf16.mxu0 0
  %1310 = vmatpush1.bf16.msra.mxu0 0
  %1311 = vmatprep.subr.bf16.mxu0 0
  %1312 = vmatpush1.bf16.msra.mxu0 0
  %1313 = vmatprep.subr.bf16.mxu0 0
  %1314 = vmatpush1.bf16.msra.mxu0 0
  %1315 = vmatprep.subr.bf16.mxu0 0
  %1316 = vmatpush1.bf16.msra.mxu0 0
  %1317 = vmatprep.subr.bf16.mxu0 0
  %1318 = vmatpush1.bf16.msra.mxu0 0
  %1319 = vmatprep.mubr.bf16.mxu0 0
  %1320 = vmatmul.mubr.bf16.gmra.mrb[0].mxu0 %v1245
  %v1321 = vpop.f32.mrb[0].mxu0
  %v1322 = vadd.f32 %v1282, %v1321
  %v1323 = vpop.f32.mrb[0].mxu0
  %v1324 = vpop.f32.mrb[0].mxu0
  %v1325 = vpop.f32.mrb[0].mxu0
  %1326 = vdwg.mxu0
  %v1327 = vmax.f32 %v1322, 0.0
  %v1328 = vtanh.pop %v1322
  %v1329 = vsel %vm290, %v1327, %v1328
  %v1330 = vpack.c.bf16 %v1329, %v1329
  %1331 = vmatprep.subr.bf16.mxu0 %v924
  %1332 = vmatpush1.bf16.msra.mxu0 %v923
  %1333 = vmatprep.subr.bf16.mxu0 %v926
  %1334 = vmatpush1.bf16.msra.mxu0 %v925
  %1335 = vmatprep.subr.bf16.mxu0 %v928
  %1336 = vmatpush1.bf16.msra.mxu0 %v927
  %1337 = vmatprep.subr.bf16.mxu0 %v930
  %1338 = vmatpush1.bf16.msra.mxu0 %v929
  %1339 = vmatprep.subr.bf16.mxu0 %v932
  %1340 = vmatpush1.bf16.msra.mxu0 %v931
  %1341 = vmatprep.subr.bf16.mxu0 %v934
  %1342 = vmatpush1.bf16.msra.mxu0 %v933
  %1343 = vmatprep.subr.bf16.mxu0 %v936
  %1344 = vmatpush1.bf16.msra.mxu0 %v935
  %1345 = vmatprep.subr.bf16.mxu0 %v938
  %1346 = vmatpush1.bf16.msra.mxu0 %v937
  %1347 = vmatprep.subr.bf16.mxu0 0
  %1348 = vmatpush1.bf16.msra.mxu0 0
  %1349 = vmatprep.subr.bf16.mxu0 0
  %1350 = vmatpush1.bf16.msra.mxu0 0
  %1351 = vmatprep.subr.bf16.mxu0 0
  %1352 = vmatpush1.bf16.msra.mxu0 0
  %1353 = vmatprep.subr.bf16.mxu0 0
  %1354 = vmatpush1.bf16.msra.mxu0 0
  %1355 = vmatprep.subr.bf16.mxu0 0
  %1356 = vmatpush1.bf16.msra.mxu0 0
  %1357 = vmatprep.subr.bf16.mxu0 0
  %1358 = vmatpush1.bf16.msra.mxu0 0
  %1359 = vmatprep.subr.bf16.mxu0 0
  %1360 = vmatpush1.bf16.msra.mxu0 0
  %1361 = vmatprep.subr.bf16.mxu0 0
  %1362 = vmatpush1.bf16.msra.mxu0 0
  %1363 = vmatprep.mubr.bf16.mxu0 0
  %1364 = vmatmul.mubr.bf16.gmra.mrb[0].mxu0 %v1330
  %v1365 = vpop.f32.mrb[0].mxu0
  %v1366 = vadd.f32 0.0, %v1365
  %v1367 = vpop.f32.mrb[0].mxu0
  %v1368 = vadd.f32 0.0, %v1367
  %v1369 = vpop.f32.mrb[0].mxu0
  %v1370 = vpop.f32.mrb[0].mxu0
  %1371 = vdwg.mxu0
  %v1372 = vmax.f32 %v1366, 0.0
  %vm1373 = vcmp.gt.f32.partialorder %v1368, 20.0
  %v1374 = vmin.f32 %v1368, 20.0
  %v1375 = vmul.f32 %v1374, 1.442695
  %v1376 = vpow.pop %v1375
  %v1377 = vadd.f32 %v1376, 1.0
  %v1378 = vlog2.pop %v1377
  %v1379 = vmul.f32 %v1378, 0.6931472
  %v1380 = vmul.f32 -0.5, %v1376
  %v1381 = vadd.f32 %v1380, 1.0
  %v1382 = vmul.f32 %v1381, %v1376
  %v1383 = vand.u32 2147483647, %v1376
  %vm1384 = vcmp.lt.f32.partialorder %v1383, 0.0004427343
  %v1385 = vsel %vm1384, %v1382, %v1379
  %v1386 = vsel %vm1373, %v1368, %v1385
  %v1387 = vsub.f32 0.0, %v1386
  %v1388 = vmul.f32 %v1387, %v1187
  %v1389 = vadd.f32 %v1372, %v1388
  %v1390 = vadd.f32 %v1187, %v1389
  %v1391 = vmax.f32 %v1390, 0.0
  %v1392 = vpack.c.bf16 %v1391, %v1391
  %1393 = vmatprep.subr.bf16.mxu0 0
  %1394 = vmatpush1.bf16.msra.mxu0 %v88
  %1395 = vmatprep.subr.bf16.mxu0 0
  %1396 = vmatpush1.bf16.msra.mxu0 %v89
  %1397 = vmatprep.subr.bf16.mxu0 0
  %1398 = vmatpush1.bf16.msra.mxu0 %v90
  %1399 = vmatprep.subr.bf16.mxu0 0
  %1400 = vmatpush1.bf16.msra.mxu0 %v91
  %1401 = vmatprep.subr.bf16.mxu0 0
  %1402 = vmatpush1.bf16.msra.mxu0 %v92
  %1403 = vmatprep.subr.bf16.mxu0 0
  %1404 = vmatpush1.bf16.msra.mxu0 %v93
  %1405 = vmatprep.subr.bf16.mxu0 0
  %1406 = vmatpush1.bf16.msra.mxu0 %v94
  %1407 = vmatprep.subr.bf16.mxu0 0
  %1408 = vmatpush1.bf16.msra.mxu0 %v95
  %1409 = vmatprep.subr.bf16.mxu0 0
  %1410 = vmatpush1.bf16.msra.mxu0 0
  %1411 = vmatprep.subr.bf16.mxu0 0
  %1412 = vmatpush1.bf16.msra.mxu0 0
  %1413 = vmatprep.subr.bf16.mxu0 0
  %1414 = vmatpush1.bf16.msra.mxu0 0
  %1415 = vmatprep.subr.bf16.mxu0 0
  %1416 = vmatpush1.bf16.msra.mxu0 0
  %1417 = vmatprep.subr.bf16.mxu0 0
  %1418 = vmatpush1.bf16.msra.mxu0 0
  %1419 = vmatprep.subr.bf16.mxu0 0
  %1420 = vmatpush1.bf16.msra.mxu0 0
  %1421 = vmatprep.subr.bf16.mxu0 0
  %1422 = vmatpush1.bf16.msra.mxu0 0
  %1423 = vmatprep.subr.bf16.mxu0 0
  %1424 = vmatpush1.bf16.msra.mxu0 0
  %1425 = vmatprep.mubr.bf16.mxu0 0
  %1426 = vmatmul.mubr.bf16.gmra.mrb[0].mxu0 %v1392
  %v1427 = vpop.f32.mrb[0].mxu0
  %v1428 = vadd.f32 0.0, %v1427
  %v1429 = vpop.f32.mrb[0].mxu0
  %v1430 = vpop.f32.mrb[0].mxu0
  %v1431 = vpop.f32.mrb[0].mxu0
  %1432 = vdwg.mxu0
  %v1433 = vmax.f32 %v1428, 0.0
  %vm1434 = vcmp.gt.f32.partialorder %v1428, 20.0
  %v1435 = vmin.f32 %v1428, 20.0
  %v1436 = vmul.f32 %v1435, 1.442695
  %v1437 = vpow.pop %v1436
  %v1438 = vadd.f32 %v1437, 1.0
  %v1439 = vlog2.pop %v1438
  %v1440 = vmul.f32 %v1439, 0.6931472
  %v1441 = vmul.f32 -0.5, %v1437
  %v1442 = vadd.f32 %v1441, 1.0
  %v1443 = vmul.f32 %v1442, %v1437
  %v1444 = vand.u32 2147483647, %v1437
  %vm1445 = vcmp.lt.f32.partialorder %v1444, 0.0004427343
  %v1446 = vsel %vm1445, %v1443, %v1440
  %v1447 = vsel %vm1434, %v1428, %v1446
  %v1448 = vsel %vm290, %v1433, %v1447
  %v1449 = vpack.c.bf16 %v1448, %v1448
  %1450 = vmatprep.subr.bf16.mxu0 0
  %1451 = vmatpush1.bf16.msra.mxu0 %v480
  %1452 = vmatprep.subr.bf16.mxu0 0
  %1453 = vmatpush1.bf16.msra.mxu0 %v481
  %1454 = vmatprep.subr.bf16.mxu0 0
  %1455 = vmatpush1.bf16.msra.mxu0 %v482
  %1456 = vmatprep.subr.bf16.mxu0 0
  %1457 = vmatpush1.bf16.msra.mxu0 %v483
  %1458 = vmatprep.subr.bf16.mxu0 0
  %1459 = vmatpush1.bf16.msra.mxu0 %v484
  %1460 = vmatprep.subr.bf16.mxu0 0
  %1461 = vmatpush1.bf16.msra.mxu0 %v485
  %1462 = vmatprep.subr.bf16.mxu0 0
  %1463 = vmatpush1.bf16.msra.mxu0 %v486
  %1464 = vmatprep.subr.bf16.mxu0 0
  %1465 = vmatpush1.bf16.msra.mxu0 %v487
  %1466 = vmatprep.subr.bf16.mxu0 0
  %1467 = vmatpush1.bf16.msra.mxu0 0
  %1468 = vmatprep.subr.bf16.mxu0 0
  %1469 = vmatpush1.bf16.msra.mxu0 0
  %1470 = vmatprep.subr.bf16.mxu0 0
  %1471 = vmatpush1.bf16.msra.mxu0 0
  %1472 = vmatprep.subr.bf16.mxu0 0
  %1473 = vmatpush1.bf16.msra.mxu0 0
  %1474 = vmatprep.subr.bf16.mxu0 0
  %1475 = vmatpush1.bf16.msra.mxu0 0
  %1476 = vmatprep.subr.bf16.mxu0 0
  %1477 = vmatpush1.bf16.msra.mxu0 0
  %1478 = vmatprep.subr.bf16.mxu0 0
  %1479 = vmatpush1.bf16.msra.mxu0 0
  %1480 = vmatprep.subr.bf16.mxu0 0
  %1481 = vmatpush1.bf16.msra.mxu0 0
  %1482 = vmatprep.mubr.bf16.mxu0 0
  %1483 = vmatmul.mubr.bf16.gmra.mrb[0].mxu0 %v1330
  %v1484 = vpop.f32.mrb[0].mxu0
  %v1485 = vadd.f32 0.0, %v1484
  %v1486 = vpop.f32.mrb[0].mxu0
  %v1487 = vpop.f32.mrb[0].mxu0
  %v1488 = vpop.f32.mrb[0].mxu0
  %1489 = vdwg.mxu0
  %1490 = vmatprep.subr.bf16.mxu0 0
  %1491 = vmatpush1.bf16.msra.mxu0 %v351
  %1492 = vmatprep.subr.bf16.mxu0 0
  %1493 = vmatpush1.bf16.msra.mxu0 %v352
  %1494 = vmatprep.subr.bf16.mxu0 0
  %1495 = vmatpush1.bf16.msra.mxu0 %v353
  %1496 = vmatprep.subr.bf16.mxu0 0
  %1497 = vmatpush1.bf16.msra.mxu0 %v354
  %1498 = vmatprep.subr.bf16.mxu0 0
  %1499 = vmatpush1.bf16.msra.mxu0 %v355
  %1500 = vmatprep.subr.bf16.mxu0 0
  %1501 = vmatpush1.bf16.msra.mxu0 %v356
  %1502 = vmatprep.subr.bf16.mxu0 0
  %1503 = vmatpush1.bf16.msra.mxu0 %v357
  %1504 = vmatprep.subr.bf16.mxu0 0
  %1505 = vmatpush1.bf16.msra.mxu0 %v358
  %1506 = vmatprep.subr.bf16.mxu0 0
  %1507 = vmatpush1.bf16.msra.mxu0 0
  %1508 = vmatprep.subr.bf16.mxu0 0
  %1509 = vmatpush1.bf16.msra.mxu0 0
  %1510 = vmatprep.subr.bf16.mxu0 0
  %1511 = vmatpush1.bf16.msra.mxu0 0
  %1512 = vmatprep.subr.bf16.mxu0 0
  %1513 = vmatpush1.bf16.msra.mxu0 0
  %1514 = vmatprep.subr.bf16.mxu0 0
  %1515 = vmatpush1.bf16.msra.mxu0 0
  %1516 = vmatprep.subr.bf16.mxu0 0
  %1517 = vmatpush1.bf16.msra.mxu0 0
  %1518 = vmatprep.subr.bf16.mxu0 0
  %1519 = vmatpush1.bf16.msra.mxu0 0
  %1520 = vmatprep.subr.bf16.mxu0 0
  %1521 = vmatpush1.bf16.msra.mxu0 0
  %1522 = vmatprep.mubr.bf16.mxu0 0
  %1523 = vmatmul.mubr.bf16.gmra.mrb[0].mxu0 %v1449
  %v1524 = vpop.f32.mrb[0].mxu0
  %v1525 = vadd.f32 %v1485, %v1524
  %v1526 = vpop.f32.mrb[0].mxu0
  %v1527 = vpop.f32.mrb[0].mxu0
  %v1528 = vpop.f32.mrb[0].mxu0
  %1529 = vdwg.mxu0
  %v1530 = vmax.f32 %v1525, 0.0
  %v1531 = vtanh.pop %v1525
  %v1532 = vsel %vm290, %v1530, %v1531
  %v1533 = vpack.c.bf16 %v1532, %v1532
  %1534 = vmatprep.subr.bf16.mxu0 %v924
  %1535 = vmatpush1.bf16.msra.mxu0 %v923
  %1536 = vmatprep.subr.bf16.mxu0 %v926
  %1537 = vmatpush1.bf16.msra.mxu0 %v925
  %1538 = vmatprep.subr.bf16.mxu0 %v928
  %1539 = vmatpush1.bf16.msra.mxu0 %v927
  %1540 = vmatprep.subr.bf16.mxu0 %v930
  %1541 = vmatpush1.bf16.msra.mxu0 %v929
  %1542 = vmatprep.subr.bf16.mxu0 %v932
  %1543 = vmatpush1.bf16.msra.mxu0 %v931
  %1544 = vmatprep.subr.bf16.mxu0 %v934
  %1545 = vmatpush1.bf16.msra.mxu0 %v933
  %1546 = vmatprep.subr.bf16.mxu0 %v936
  %1547 = vmatpush1.bf16.msra.mxu0 %v935
  %1548 = vmatprep.subr.bf16.mxu0 %v938
  %1549 = vmatpush1.bf16.msra.mxu0 %v937
  %1550 = vmatprep.subr.bf16.mxu0 0
  %1551 = vmatpush1.bf16.msra.mxu0 0
  %1552 = vmatprep.subr.bf16.mxu0 0
  %1553 = vmatpush1.bf16.msra.mxu0 0
  %1554 = vmatprep.subr.bf16.mxu0 0
  %1555 = vmatpush1.bf16.msra.mxu0 0
  %1556 = vmatprep.subr.bf16.mxu0 0
  %1557 = vmatpush1.bf16.msra.mxu0 0
  %1558 = vmatprep.subr.bf16.mxu0 0
  %1559 = vmatpush1.bf16.msra.mxu0 0
  %1560 = vmatprep.subr.bf16.mxu0 0
  %1561 = vmatpush1.bf16.msra.mxu0 0
  %1562 = vmatprep.subr.bf16.mxu0 0
  %1563 = vmatpush1.bf16.msra.mxu0 0
  %1564 = vmatprep.subr.bf16.mxu0 0
  %1565 = vmatpush1.bf16.msra.mxu0 0
  %1566 = vmatprep.mubr.bf16.mxu0 0
  %1567 = vmatmul.mubr.bf16.gmra.mrb[0].mxu0 %v1533
  %v1568 = vpop.f32.mrb[0].mxu0
  %v1569 = vadd.f32 0.0, %v1568
  %v1570 = vpop.f32.mrb[0].mxu0
  %v1571 = vadd.f32 0.0, %v1570
  %v1572 = vpop.f32.mrb[0].mxu0
  %v1573 = vpop.f32.mrb[0].mxu0
  %1574 = vdwg.mxu0
  %v1575 = vmax.f32 %v1569, 0.0
  %vm1576 = vcmp.gt.f32.partialorder %v1571, 20.0
  %v1577 = vmin.f32 %v1571, 20.0
  %v1578 = vmul.f32 %v1577, 1.442695
  %v1579 = vpow.pop %v1578
  %v1580 = vadd.f32 %v1579, 1.0
  %v1581 = vlog2.pop %v1580
  %v1582 = vmul.f32 %v1581, 0.6931472
  %v1583 = vmul.f32 -0.5, %v1579
  %v1584 = vadd.f32 %v1583, 1.0
  %v1585 = vmul.f32 %v1584, %v1579
  %v1586 = vand.u32 2147483647, %v1579
  %vm1587 = vcmp.lt.f32.partialorder %v1586, 0.0004427343
  %v1588 = vsel %vm1587, %v1585, %v1582
  %v1589 = vsel %vm1576, %v1571, %v1588
  %v1590 = vsub.f32 0.0, %v1589
  %v1591 = vmul.f32 %v1590, %v1391
  %v1592 = vadd.f32 %v1575, %v1591
  %v1593 = vadd.f32 %v1391, %v1592
  %v1594 = vmax.f32 %v1593, 0.0
  %1595 = vst [vmem:[%s5] sm:$0xff] %v1164
  %1596 = vst [vmem:[%s5 + $0x8] sm:$0xff] %v1165
  %1597 = vst [vmem:[%s5 + $0x10] sm:$0xff] %v1166
  %1598 = vst [vmem:[%s5 + $0x18] sm:$0xff] %v1167
  %1599 = vst [vmem:[%s5 + $0x20] sm:$0xff] %v1168
  %1600 = vst [vmem:[%s5 + $0x28] sm:$0xff] %v1169
  %1601 = vst [vmem:[%s5 + $0x30] sm:$0xff] %v1170
  %1602 = vst [vmem:[%s5 + $0x38] sm:$0xff] %v1171
  %1603 = vst [vmem:[%s5 + $0x40] sm:$0xff] %v1389
  %1604 = vst [vmem:[%s5 + $0x48] sm:$0xff] %v1592
  %1605 = vst [vmem:[%s6] sm:$0xff] %v1180
  %1606 = vst [vmem:[%s6 + $0x8] sm:$0xff] %v1181
  %1607 = vst [vmem:[%s6 + $0x10] sm:$0xff] %v1182
  %1608 = vst [vmem:[%s6 + $0x18] sm:$0xff] %v1183
  %1609 = vst [vmem:[%s6 + $0x20] sm:$0xff] %v1184
  %1610 = vst [vmem:[%s6 + $0x28] sm:$0xff] %v1185
  %1611 = vst [vmem:[%s6 + $0x30] sm:$0xff] %v1186
  %1612 = vst [vmem:[%s6 + $0x38] sm:$0xff] %v1187
  %1613 = vst [vmem:[%s6 + $0x40] sm:$0xff] %v1391
  %1614 = vst [vmem:[%s6 + $0x48] sm:$0xff] %v1594
  %1615 = vst [vmem:[%s7] sm:$0xff] %v1148
  %1616 = vst [vmem:[%s7 + $0x8] sm:$0xff] %v1149
  %1617 = vst [vmem:[%s7 + $0x10] sm:$0xff] %v1150
  %1618 = vst [vmem:[%s7 + $0x18] sm:$0xff] %v1151
  %1619 = vst [vmem:[%s7 + $0x20] sm:$0xff] %v1152
  %1620 = vst [vmem:[%s7 + $0x28] sm:$0xff] %v1153
  %1621 = vst [vmem:[%s7 + $0x30] sm:$0xff] %v1154
  %1622 = vst [vmem:[%s7 + $0x38] sm:$0xff] %v1155
  %1623 = vst [vmem:[%s7 + $0x40] sm:$0xff] %v1387
  %1624 = vst [vmem:[%s7 + $0x48] sm:$0xff] %v1590
  %1625 = vst [vmem:[%s8] sm:$0xff] %v539
  %1626 = vst [vmem:[%s8 + $0x8] sm:$0xff] %v584
  %1627 = vst [vmem:[%s8 + $0x10] sm:$0xff] %v629
  %1628 = vst [vmem:[%s8 + $0x18] sm:$0xff] %v674
  %1629 = vst [vmem:[%s8 + $0x20] sm:$0xff] %v719
  %1630 = vst [vmem:[%s8 + $0x28] sm:$0xff] %v764
  %1631 = vst [vmem:[%s8 + $0x30] sm:$0xff] %v809
  %1632 = vst [vmem:[%s8 + $0x38] sm:$0xff] %v854
  %1633 = vst [vmem:[%s8 + $0x40] sm:$0xff] %v1329
  %1634 = vst [vmem:[%s8 + $0x48] sm:$0xff] %v1532
  // Predicated region
  $region22: #{supirfactor_biophysical_forward.1} parent=0 // pred_check
    _
  $region23: #{supirfactor_biophysical_forward.1} parent=0 // pred_check_branch
    %1636 = sbr.rel (0) target = $region25
  $region24: #{supirfactor_biophysical_forward.1} parent=0 // pred_region
    _
  $region25: #{supirfactor_biophysical_forward.1} parent=0 // pred_fallthru
    _
  // Predicated region
  $region26: #{supirfactor_biophysical_forward.1} parent=0 // pred_check
    _
  $region27: #{supirfactor_biophysical_forward.1} parent=0 // pred_check_branch
    %1638 = sbr.rel (0) target = $region29
  $region28: #{supirfactor_biophysical_forward.1} parent=0 // pred_region
    _
  $region29: #{supirfactor_biophysical_forward.1} parent=0 // pred_fallthru
    _
  // Predicated region
  $region30: #{supirfactor_biophysical_forward.1} parent=0 // pred_check
    _
  $region31: #{supirfactor_biophysical_forward.1} parent=0 // pred_check_branch
    %1640 = sbr.rel (0) target = $region33
  $region32: #{supirfactor_biophysical_forward.1} parent=0 // pred_region
    _
  $region33: #{supirfactor_biophysical_forward.1} parent=0 // pred_fallthru
    _
  // Predicated region
  $region34: #{supirfactor_biophysical_forward.1} parent=0 // pred_check
    _
  $region35: #{supirfactor_biophysical_forward.1} parent=0 // pred_check_branch
    %1642 = sbr.rel (0) target = $region37
  $region36: #{supirfactor_biophysical_forward.1} parent=0 // pred_region
    _
  $region37: #{supirfactor_biophysical_forward.1} parent=0 // pred_fallthru
    _
  // Predicated region
  $region38: #{supirfactor_biophysical_forward.1} parent=0 // pred_check
    _
  $region39: #{supirfactor_biophysical_forward.1} parent=0 // pred_check_branch
    %1644 = sbr.rel (0) target = $region41
  $region40: #{supirfactor_biophysical_forward.1} parent=0 // pred_region
    _
  $region41: #{supirfactor_biophysical_forward.1} parent=0 // pred_fallthru
    _
  // Predicated region
  $region42: #{supirfactor_biophysical_forward.1} parent=0 // pred_check
    _
  $region43: #{supirfactor_biophysical_forward.1} parent=0 // pred_check_branch
    %1646 = sbr.rel (0) target = $region45
  $region44: #{supirfactor_biophysical_forward.1} parent=0 // pred_region
    _
  $region45: #{supirfactor_biophysical_forward.1} parent=0 // pred_fallthru
    _
  // Predicated region
  $region46: #{supirfactor_biophysical_forward.1} parent=0 // pred_check
    _
  $region47: #{supirfactor_biophysical_forward.1} parent=0 // pred_check_branch
    %1648 = sbr.rel (0) target = $region49
  $region48: #{supirfactor_biophysical_forward.1} parent=0 // pred_region
    _
  $region49: #{supirfactor_biophysical_forward.1} parent=0 // pred_fallthru
    _
  // Predicated region
  $region50: #{supirfactor_biophysical_forward.1} parent=0 // pred_check
    _
  $region51: #{supirfactor_biophysical_forward.1} parent=0 // pred_check_branch
    %1650 = sbr.rel (0) target = $region53
  $region52: #{supirfactor_biophysical_forward.1} parent=0 // pred_region
    _
  $region53: #{supirfactor_biophysical_forward.1} parent=0 // pred_fallthru
    _

</llo_original>
